<compile_context>
chip_gen: v5e
topology: v5e:2x2
jax: 0.10.0
libtpu: 0.0.40
codegen_flags: <defaults>
</compile_context>

<pallas_src>
import math

import jax
import jax.numpy as jnp
from jax.experimental import pallas as pl
from jax.experimental.pallas import tpu as pltpu


def _round_up(x, m):
    return ((x + m - 1) // m) * m


# --------------------------------------------------------------------------
# Fused kernel: out = M.T @ (X @ W) + bias
#   grid = (E_tiles, N_tiles); N is the reduction axis (last, "arbitrary").
#   Accumulates directly into the f32 output block (resident across n).
# --------------------------------------------------------------------------
def _fused_gcn_edge_kernel(x_ref, w_ref, m_ref, b_ref, o_ref):
    n = pl.program_id(1)

    @pl.when(n == 0)
    def _init():
        o_ref[...] = jnp.zeros_like(o_ref)

    # support tile (tile_n, fo_p), recomputed per step in VMEM (never hits HBM).
    support = jnp.dot(x_ref[...], w_ref[...],
                      preferred_element_type=jnp.float32)

    # out[e, f] += sum_n M[n, e] * support[n, f]
    # Contraction over axis 0 of both operands -> no materialized transpose.
    o_ref[...] += jax.lax.dot_general(
        m_ref[...], support.astype(m_ref.dtype),
        dimension_numbers=(((0,), (0,)), ((), ())),
        preferred_element_type=jnp.float32)

    @pl.when(n == pl.num_programs(1) - 1)
    def _finalize():
        o_ref[...] += b_ref[...]          # bias added exactly once


# --------------------------------------------------------------------------
# Unfused path (used when F_in > F_out): support = X @ W, then aggregate.
# --------------------------------------------------------------------------
def _support_kernel(x_ref, w_ref, s_ref):
    s_ref[...] = jnp.dot(
        x_ref[...], w_ref[...], preferred_element_type=jnp.float32
    ).astype(s_ref.dtype)


def _aggregate_kernel(m_ref, s_ref, b_ref, o_ref):
    n = pl.program_id(1)

    @pl.when(n == 0)
    def _init():
        o_ref[...] = jnp.zeros_like(o_ref)

    o_ref[...] += jax.lax.dot_general(
        m_ref[...], s_ref[...],
        dimension_numbers=(((0,), (0,)), ((), ())),
        preferred_element_type=jnp.float32)

    @pl.when(n == pl.num_programs(1) - 1)
    def _finalize():
        o_ref[...] += b_ref[...]


# --------------------------------------------------------------------------
# Wrapper
# --------------------------------------------------------------------------
def _pad_cast(a, shape, dtype):
    """Cast then zero-pad, skipping either step when it is a no-op."""
    if a.dtype != dtype:
        a = a.astype(dtype)
    if tuple(a.shape) != tuple(shape):
        a = jnp.pad(a, [(0, s - d) for d, s in zip(a.shape, shape)])
    return a


def gcn_edge_forward(x, weight, m, bias=None, *,
                     tile_e=512, tile_n=512,
                     compute_dtype=jnp.bfloat16,
                     fuse=None,
                     vmem_limit_bytes=None):
    """Pallas TPU forward of GraphConvolution_edge: M.T @ (x @ weight) + bias."""
    N, F_in = x.shape
    F_in2, F_out = weight.shape
    assert F_in == F_in2
    N2, E = m.shape
    assert N == N2
    assert tile_e % 256 == 0 and tile_n % 256 == 0

    if fuse is None:
        fuse = F_in <= F_out       # recompute support only when X tiles are cheaper

    cd = jnp.dtype(compute_dtype).itemsize
    out_dtype = jnp.float32

    # ---- tile-friendly padded sizes (zero padding is exact) ----------------
    fi_p = _round_up(F_in, 128)
    fo_p = _round_up(F_out, 128)
    tile_n = min(tile_n, _round_up(N, 256))
    tile_e = min(tile_e, _round_up(E, 256))
    n_p = _round_up(N, tile_n)
    e_p = _round_up(E, tile_e)
    n_tiles = n_p // tile_n
    e_tiles = e_p // tile_e

    xp = _pad_cast(x, (n_p, fi_p), compute_dtype)
    wp = _pad_cast(weight, (fi_p, fo_p), compute_dtype)
    mp = _pad_cast(m, (n_p, e_p), compute_dtype)
    if bias is None:
        bp = jnp.zeros((1, fo_p), jnp.float32)
    else:
        bp = _pad_cast(bias.reshape(1, F_out), (1, fo_p), jnp.float32)

    # ---- VMEM budget (double-buffered blocks), capped below v7x's 64 MiB ---
    if vmem_limit_bytes is None:
        working = 2 * (tile_n * fi_p * cd          # X block
                       + fi_p * fo_p * cd          # W (resident)
                       + tile_n * tile_e * cd      # M block
                       + fo_p * 4                  # bias
                       + tile_e * fo_p * 4)        # output block (f32)
        if not fuse:
            working += 2 * tile_n * fo_p * cd      # support stream
        vmem_limit_bytes = int(min(max(2 * working, 32 << 20), 56 << 20))

    if fuse:
        # ---- fused: out = M.T @ (X @ W) + bias ------------------------------
        out_p = pl.pallas_call(
            _fused_gcn_edge_kernel,
            out_shape=jax.ShapeDtypeStruct((e_p, fo_p), out_dtype),
            grid_spec=pltpu.PrefetchScalarGridSpec(
                num_scalar_prefetch=0,
                grid=(e_tiles, n_tiles),                  # reduction (N) axis last
                in_specs=[
                    pl.BlockSpec((tile_n, fi_p), lambda e, n: (n, 0)),    # X
                    pl.BlockSpec((fi_p, fo_p), lambda e, n: (0, 0)),      # W resident
                    pl.BlockSpec((tile_n, tile_e), lambda e, n: (n, e)),  # M
                    pl.BlockSpec((1, fo_p), lambda e, n: (0, 0)),         # bias
                ],
                out_specs=pl.BlockSpec((tile_e, fo_p), lambda e, n: (e, 0)),
            ),
            compiler_params=pltpu.CompilerParams(
                dimension_semantics=("parallel", "arbitrary"),
                vmem_limit_bytes=vmem_limit_bytes),
            cost_estimate=pl.CostEstimate(
                flops=2 * e_p * n_p * fo_p + 2 * e_tiles * n_p * fi_p * fo_p,
                transcendentals=0,
                bytes_accessed=(n_p * e_p * cd                 # M once
                                + e_tiles * n_p * fi_p * cd    # X per E tile
                                + fi_p * fo_p * cd             # W
                                + fo_p * 4                     # bias
                                + e_p * fo_p * 4)),            # output
        )(xp, wp, mp, bp)
        return out_p[:E, :F_out]

    # ---- unfused: support = X @ W ------------------------------------------
    support = pl.pallas_call(
        _support_kernel,
        out_shape=jax.ShapeDtypeStruct((n_p, fo_p), compute_dtype),
        grid_spec=pltpu.PrefetchScalarGridSpec(
            num_scalar_prefetch=0,
            grid=(n_tiles,),
            in_specs=[
                pl.BlockSpec((tile_n, fi_p), lambda i: (i, 0)),
                pl.BlockSpec((fi_p, fo_p), lambda i: (0, 0)),
            ],
            out_specs=pl.BlockSpec((tile_n, fo_p), lambda i: (i, 0)),
        ),
        compiler_params=pltpu.CompilerParams(
            dimension_semantics=("parallel",),
            vmem_limit_bytes=vmem_limit_bytes),
        cost_estimate=pl.CostEstimate(
            flops=2 * n_p * fi_p * fo_p,
            transcendentals=0,
            bytes_accessed=(n_p * fi_p * cd + fi_p * fo_p * cd
                            + n_p * fo_p * cd)),
    )(xp, wp)

    # ---- unfused: output = M.T @ support + bias -----------------------------
    out_p = pl.pallas_call(
        _aggregate_kernel,
        out_shape=jax.ShapeDtypeStruct((e_p, fo_p), out_dtype),
        grid_spec=pltpu.PrefetchScalarGridSpec(
            num_scalar_prefetch=0,
            grid=(e_tiles, n_tiles),
            in_specs=[
                pl.BlockSpec((tile_n, tile_e), lambda e, n: (n, e)),  # M
                pl.BlockSpec((tile_n, fo_p), lambda e, n: (n, 0)),    # support
                pl.BlockSpec((1, fo_p), lambda e, n: (0, 0)),         # bias
            ],
            out_specs=pl.BlockSpec((tile_e, fo_p), lambda e, n: (e, 0)),
        ),
        compiler_params=pltpu.CompilerParams(
            dimension_semantics=("parallel", "arbitrary"),
            vmem_limit_bytes=vmem_limit_bytes),
        cost_estimate=pl.CostEstimate(
            flops=2 * e_p * n_p * fo_p,
            transcendentals=0,
            bytes_accessed=(n_p * e_p * cd
                            + e_tiles * n_p * fo_p * cd   # support re-read per E tile
                            + fo_p * 4
                            + e_p * fo_p * 4)),
    )(mp, support, bp)

    return out_p[:E, :F_out]


if __name__ == "__main__":
    # Small but tile-exercising sizes: padded to (n_p, e_p) = (512, 768) with
    # tile 256 -> aggregation grid (3 E-tiles, 2 N-tiles), plus F_in/F_out and
    # E padding paths.
    N, E = 512, 640
    F_IN, F_OUT = 48, 200

    key = jax.random.PRNGKey(0)
    kx, km, kw, kb = jax.random.split(key, 4)

    x = jax.random.normal(kx, (N, F_IN), dtype=jnp.float32)
    m = jax.random.normal(km, (N, E), dtype=jnp.float32)

    # reset_parameters(): uniform(-stdv, stdv) with stdv = 1/sqrt(out_features)
    stdv = 1.0 / math.sqrt(F_OUT)
    weight = jax.random.uniform(kw, (F_IN, F_OUT), jnp.float32, -stdv, stdv)
    bias = jax.random.uniform(kb, (F_OUT,), jnp.float32, -stdv, stdv)

    out_fused = jax.block_until_ready(
        gcn_edge_forward(x, weight, m, bias, tile_e=256, tile_n=256))
    out_unfused = jax.block_until_ready(
        gcn_edge_forward(x, weight, m, bias, tile_e=256, tile_n=256, fuse=False))
    assert out_fused.shape == (E, F_OUT)
    assert out_unfused.shape == (E, F_OUT)

    # Reference from the same bf16-rounded operands the kernel consumes
    # (f32 accumulation on both sides) -> isolates kernel correctness.
    bf = lambda a: a.astype(jnp.bfloat16).astype(jnp.float32)
    support_q = bf(bf(x) @ bf(weight))
    ref_q = bf(m).T @ support_q + bias
    for name, out in (("fused", out_fused), ("unfused", out_unfused)):
        err = float(jnp.max(jnp.abs(out - ref_q)))
        assert jnp.allclose(out, ref_q, atol=3e-2, rtol=1e-2), (name, err)

    # Loose sanity check against full-f32 PyTorch semantics (bf16 quantization
    # of the operands is the only difference).
    ref_f32 = m.T @ (x @ weight) + bias
    assert jnp.allclose(out_fused, ref_f32, atol=0.5, rtol=0.05)

    # bias=None path
    out_nb = jax.block_until_ready(
        gcn_edge_forward(x, weight, m, None, tile_e=256, tile_n=256))
    assert jnp.allclose(out_nb, ref_q - bias, atol=3e-2, rtol=1e-2)

    print("KERNEL_OK")
</pallas_src>

<mosaic_0001>
module attributes {stable_mosaic.version = 11 : i64} {
  func.func @_fused_gcn_edge_kernel(%arg0: i32, %arg1: i32, %arg2: memref<256x128xbf16, #tpu.memory_space<vmem>>, %arg3: memref<128x256xbf16, #tpu.memory_space<vmem>>, %arg4: memref<256x256xbf16, #tpu.memory_space<vmem>>, %arg5: memref<1x256xf32, #tpu.memory_space<vmem>>, %arg6: memref<256x256xf32, #tpu.memory_space<vmem>>) attributes {dimension_semantics = [#tpu.dimension_semantics<parallel>, #tpu.dimension_semantics<arbitrary>], iteration_bounds = array<i64: 3, 2>, scalar_prefetch = 0 : i64, scratch_operands = 0 : i64, tpu.core_type = #tpu.core_type<tc>, window_params = [{transform_indices = @transform_0, window_bounds = array<i64: 256, 128>}, {pipeline_mode = #tpu.pipeline_mode<synchronous>, transform_indices = @transform_1, window_bounds = array<i64: 128, 256>}, {transform_indices = @transform_2, window_bounds = array<i64: 256, 256>}, {pipeline_mode = #tpu.pipeline_mode<synchronous>, transform_indices = @transform_3, window_bounds = array<i64: 1, 256>}, {transform_indices = @transform_4, window_bounds = array<i64: 256, 256>}]} {
    %c0_i32 = arith.constant 0 : i32
    %0 = arith.cmpi eq, %arg1, %c0_i32 : i32
    %1 = arith.extui %0 : i1 to i32
    %c0_i32_0 = arith.constant 0 : i32
    %2 = arith.cmpi ne, %1, %c0_i32_0 : i32
    scf.if %2 {
      %cst_12 = arith.constant 0.000000e+00 : f32
      %15 = vector.broadcast %cst_12 : f32 to vector<256x256xf32>
      %c0_13 = arith.constant 0 : index
      %c0_14 = arith.constant 0 : index
      %16 = vector.load %arg6[%c0_13, %c0_14] : memref<256x256xf32, #tpu.memory_space<vmem>>, vector<256x256xf32>
      tpu.vector_store %arg6[%c0_13, %c0_14], %15 {strides = array<i32>} : memref<256x256xf32, #tpu.memory_space<vmem>>, vector<256x256xf32>,
    } else {
    }
    %c0 = arith.constant 0 : index
    %c0_1 = arith.constant 0 : index
    %3 = vector.load %arg2[%c0, %c0_1] : memref<256x128xbf16, #tpu.memory_space<vmem>>, vector<256x128xbf16>
    %c0_2 = arith.constant 0 : index
    %c0_3 = arith.constant 0 : index
    %4 = vector.load %arg3[%c0_2, %c0_3] : memref<128x256xbf16, #tpu.memory_space<vmem>>, vector<128x256xbf16>
    %cst = arith.constant dense<0.000000e+00> : vector<256x256xf32>
    %5 = tpu.matmul %3, %4, %cst {dimension_numbers = #tpu.dot_dimension_numbers<[1], [0], [0], [1], [0, 0, 1, 1], [], []>} : vector<256x128xbf16>, vector<128x256xbf16>, vector<256x256xf32> -> vector<256x256xf32>
    %c0_4 = arith.constant 0 : index
    %c0_5 = arith.constant 0 : index
    %6 = vector.load %arg6[%c0_4, %c0_5] : memref<256x256xf32, #tpu.memory_space<vmem>>, vector<256x256xf32>
    %c0_6 = arith.constant 0 : index
    %c0_7 = arith.constant 0 : index
    %7 = vector.load %arg4[%c0_6, %c0_7] : memref<256x256xbf16, #tpu.memory_space<vmem>>, vector<256x256xbf16>
    %8 = arith.truncf %5 : vector<256x256xf32> to vector<256x256xbf16>
    %cst_8 = arith.constant dense<0.000000e+00> : vector<256x256xf32>
    %9 = tpu.matmul %7, %8, %cst_8 {dimension_numbers = #tpu.dot_dimension_numbers<[0], [0], [1], [1], [0, 1, 1, 1], [], []>} : vector<256x256xbf16>, vector<256x256xbf16>, vector<256x256xf32> -> vector<256x256xf32>
    %10 = arith.addf %6, %9 : vector<256x256xf32>
    %c0_9 = arith.constant 0 : index
    %c0_10 = arith.constant 0 : index
    %11 = vector.load %arg6[%c0_9, %c0_10] : memref<256x256xf32, #tpu.memory_space<vmem>>, vector<256x256xf32>
    tpu.vector_store %arg6[%c0_9, %c0_10], %10 {strides = array<i32>} : memref<256x256xf32, #tpu.memory_space<vmem>>, vector<256x256xf32>,
    %c1_i32 = arith.constant 1 : i32
    %12 = arith.cmpi eq, %arg1, %c1_i32 : i32
    %13 = arith.extui %12 : i1 to i32
    %c0_i32_11 = arith.constant 0 : i32
    %14 = arith.cmpi ne, %13, %c0_i32_11 : i32
    scf.if %14 {
      %c0_12 = arith.constant 0 : index
      %c0_13 = arith.constant 0 : index
      %15 = vector.load %arg6[%c0_12, %c0_13] : memref<256x256xf32, #tpu.memory_space<vmem>>, vector<256x256xf32>
      %c0_14 = arith.constant 0 : index
      %c0_15 = arith.constant 0 : index
      %16 = vector.load %arg5[%c0_14, %c0_15] : memref<1x256xf32, #tpu.memory_space<vmem>>, vector<1x256xf32>
      %17 = vector.broadcast %16 : vector<1x256xf32> to vector<256x256xf32>
      %18 = arith.addf %15, %17 : vector<256x256xf32>
      %c0_16 = arith.constant 0 : index
      %c0_17 = arith.constant 0 : index
      %19 = vector.load %arg6[%c0_16, %c0_17] : memref<256x256xf32, #tpu.memory_space<vmem>>, vector<256x256xf32>
      tpu.vector_store %arg6[%c0_16, %c0_17], %18 {strides = array<i32>} : memref<256x256xf32, #tpu.memory_space<vmem>>, vector<256x256xf32>,
    } else {
    }
    return
  }
  func.func @transform_0(%arg0: i32, %arg1: i32) -> (i32, i32) {
    %c0_i32 = arith.constant 0 : i32
    %c0_i32_0 = arith.constant 0 : i32
    return %arg1, %c0_i32 : i32, i32
  }
  func.func @transform_1(%arg0: i32, %arg1: i32) -> (i32, i32) {
    %c0_i32 = arith.constant 0 : i32
    %c0_i32_0 = arith.constant 0 : i32
    %c0_i32_1 = arith.constant 0 : i32
    return %c0_i32, %c0_i32_0 : i32, i32
  }
  func.func @transform_2(%arg0: i32, %arg1: i32) -> (i32, i32) {
    %c0_i32 = arith.constant 0 : i32
    return %arg1, %arg0 : i32, i32
  }
  func.func @transform_3(%arg0: i32, %arg1: i32) -> (i32, i32) {
    %c0_i32 = arith.constant 0 : i32
    %c0_i32_0 = arith.constant 0 : i32
    %c0_i32_1 = arith.constant 0 : i32
    return %c0_i32, %c0_i32_0 : i32, i32
  }
  func.func @transform_4(%arg0: i32, %arg1: i32) -> (i32, i32) {
    %c0_i32 = arith.constant 0 : i32
    %c0_i32_0 = arith.constant 0 : i32
    return %arg0, %c0_i32 : i32, i32
  }
}

</mosaic_0001>

<llo_original>
// kernel: tpu_custom_call.1
$region0: #{tpu_custom_call.1}
  #allocation0 [shape = 'u32[]', space=smem, size = 0x4, offset = 0x4, fixed_abs, tag = 'smem constant byte address 0x4 - core index']
  #allocation1 [shape = 'u32[72,128]{1,0:T(1,128)}', space=vmem, size = 0x9000, scoped, tag = 'internal scratch']
  %s0 = inlined_call_operand.hbm [shape: bf16[512,128], index: 0, kind: input, shape index: {}]
  %s1 = inlined_call_operand.hbm [shape: bf16[128,256], index: 1, kind: input, shape index: {}]
  %s2 = inlined_call_operand.hbm [shape: bf16[512,768], index: 2, kind: input, shape index: {}]
  %s3 = inlined_call_operand.vmem [shape: f32[1,256], index: 3, kind: input, shape index: {}]
  %s4 = inlined_call_operand.hbm [shape: f32[768,256], index: 4, kind: output, shape index: {}]
  %s5 = sld [smem:[#allocation0]]
  $region69: #{tpu_custom_call.1} parent=0
    _
  %s7 = ssub.s32 1, %s5
  %s8 = scalar_select 0, %s7, %s5
  $region1: #{tpu_custom_call.1} parent=0
    #allocation2 [shape = 'u8[131072]{0}', space=vmem, size = 0x20000, scoped, tag = 'input window, operand 0']
    #allocation3 [shape = 's32[2]{0}', space=sflag, size = 0x8, scoped, tag = 'scoped memory for tpu_custom_call.1']
    #allocation4 [shape = 's32[2]{0}', space=sflag, size = 0x8, scoped, tag = 'scoped memory for tpu_custom_call.1']
    #allocation5 [shape = 'u8[65536]{0}', space=vmem, size = 0x10000, scoped, tag = 'input window, operand 1, single buffered']
    #allocation6 [shape = 's32[1]{0}', space=sflag, size = 0x4, scoped, tag = 'scoped memory for tpu_custom_call.1']
    #allocation7 [shape = 'u8[262144]{0}', space=vmem, size = 0x40000, scoped, tag = 'input window, operand 2']
    #allocation8 [shape = 'u8[524288]{0}', space=vmem, size = 0x80000, scoped, tag = 'output window, operand 0']
    %9 = vsyncpa [#allocation3], 0
    %s10 = scalar_lea.sflag [#allocation3], 1
    %11 = vsyncpa %s10, 0
    %12 = vsyncpa [#allocation6], 0
    %13 = vsyncpa [#allocation4], 0
    %s14 = scalar_lea.sflag [#allocation4], 1
    %15 = vsyncpa %s14, 0
    loop: start=0, step=1, limit=8
    $region2: #{tpu_custom_call.1} parent=1 // loop_pre_header
      _
    $region3: #{tpu_custom_call.1} parent=1 // loop_header
      %s17 = sphi 0, %s21
      %p18 = scmp.ge.s32.totalorder %s17, 8
      %s24 = sphi 0, %s36
      %s25 = sphi 0, %s32
      %s26 = sphi 0, %s24
      %s27 = sphi 0, %s25
      %s28 = sphi 0, %s26
      %s29 = sphi 0, %s27
      %s39 = sphi 0, %s41
      %s42 = sphi 0, %s39
      %s43 = sphi 0, %s42
      %s59 = sphi 0, %s43
      %s63 = sphi 0, %s63
      %s65 = sphi 0, %s63
      %s66 = sphi 0, %s65
      %s80 = sphi 0, %s66
      %s88 = sphi 0, %s90
      %s91 = sphi 0, %s88
      %s92 = sphi 0, %s91
      %s108 = sphi 0, %s92
      %s112 = sphi 0, %s112
      %s114 = sphi 0, %s112
      %s115 = sphi 0, %s114
      %s129 = sphi 0, %s115
      %s135 = sphi 0, %s137
      %s138 = sphi 0, %s135
      %s139 = sphi 0, %s138
      %s155 = sphi 0, %s139
    $region4: #{tpu_custom_call.1} parent=1 // loop_header_branch
      %20 = sbr.rel (%p18) target = $region8
    $region5: #{tpu_custom_call.1} parent=1 // loop_body
      %s22 = ssub.s32 %s17, 1
      %s23 = ssub.s32 %s17, 2
      %s30 = sadd.s32 1, %s25
      %p31 = scmp.ge.s32.totalorder %s30, 2
      %s32 = scalar_select %p31, 0, %s30
      %s33 = sadd.s32 1, %s24
      %s34 = scalar_select %p31, %s33, %s24
      %p35 = scmp.ge.s32.totalorder %s34, 3
      %s36 = scalar_select %p35, 0, %s34
      %s37 = ssub.s32 %s25, %s32
      %p38 = scmp.eq.s32.totalorder %s37, 0
      %s40 = sadd.s32 %s39, 1
      %s41 = scalar_select %p38, %s39, %s40
      %p44 = pneg %p38
      %p45 = scmp.eq.s32.totalorder %s17, 5
      %p46 = por %p44, %p45
      %p47 = scmp.ne.s32.totalorder %s39, %s42
      %p48 = scmp.eq.s32.totalorder %s17, 0
      %p49 = por %p47, %p48
      %p50 = scmp.ne.s32.totalorder %s39, %s42
      %p51 = scmp.eq.s32.totalorder %s22, 5
      %p52 = por %p50, %p51
      %p53 = scmp.ne.s32.totalorder %s42, %s43
      %p54 = scmp.eq.s32.totalorder %s22, 0
      %p55 = por %p53, %p54
      %p56 = scmp.ne.s32.totalorder %s42, %s43
      %p57 = scmp.eq.s32.totalorder %s23, 5
      %p58 = por %p56, %p57
      %p60 = scmp.ne.s32.totalorder %s43, %s59
      %p61 = scmp.eq.s32.totalorder %s23, 0
      %p62 = por %p60, %p61
      %s64 = sadd.s32 %s63, 1
      %p67 = scmp.eq.s32.totalorder %s17, 5
      %p68 = scmp.ne.s32.totalorder %s63, %s65
      %p69 = scmp.eq.s32.totalorder %s17, 0
      %p70 = por %p68, %p69
      %p71 = scmp.ne.s32.totalorder %s63, %s65
      %p72 = scmp.eq.s32.totalorder %s22, 5
      %p73 = por %p71, %p72
      %p74 = scmp.ne.s32.totalorder %s65, %s66
      %p75 = scmp.eq.s32.totalorder %s22, 0
      %p76 = por %p74, %p75
      %p77 = scmp.ne.s32.totalorder %s65, %s66
      %p78 = scmp.eq.s32.totalorder %s23, 5
      %p79 = por %p77, %p78
      %p81 = scmp.ne.s32.totalorder %s66, %s80
      %p82 = scmp.eq.s32.totalorder %s23, 0
      %p83 = por %p81, %p82
      %s84 = ssub.s32 %s25, %s32
      %s85 = ssub.s32 %s24, %s36
      %s86 = sor.u32 %s84, %s85
      %p87 = scmp.eq.s32.totalorder %s86, 0
      %s89 = sadd.s32 %s88, 1
      %s90 = scalar_select %p87, %s88, %s89
      %p93 = pneg %p87
      %p94 = scmp.eq.s32.totalorder %s17, 5
      %p95 = por %p93, %p94
      %p96 = scmp.ne.s32.totalorder %s88, %s91
      %p97 = scmp.eq.s32.totalorder %s17, 0
      %p98 = por %p96, %p97
      %p99 = scmp.ne.s32.totalorder %s88, %s91
      %p100 = scmp.eq.s32.totalorder %s22, 5
      %p101 = por %p99, %p100
      %p102 = scmp.ne.s32.totalorder %s91, %s92
      %p103 = scmp.eq.s32.totalorder %s22, 0
      %p104 = por %p102, %p103
      %p105 = scmp.ne.s32.totalorder %s91, %s92
      %p106 = scmp.eq.s32.totalorder %s23, 5
      %p107 = por %p105, %p106
      %p109 = scmp.ne.s32.totalorder %s92, %s108
      %p110 = scmp.eq.s32.totalorder %s23, 0
      %p111 = por %p109, %p110
      %s113 = sadd.s32 %s112, 1
      %p116 = scmp.eq.s32.totalorder %s17, 5
      %p117 = scmp.ne.s32.totalorder %s112, %s114
      %p118 = scmp.eq.s32.totalorder %s17, 0
      %p119 = por %p117, %p118
      %p120 = scmp.ne.s32.totalorder %s112, %s114
      %p121 = scmp.eq.s32.totalorder %s22, 5
      %p122 = por %p120, %p121
      %p123 = scmp.ne.s32.totalorder %s114, %s115
      %p124 = scmp.eq.s32.totalorder %s22, 0
      %p125 = por %p123, %p124
      %p126 = scmp.ne.s32.totalorder %s114, %s115
      %p127 = scmp.eq.s32.totalorder %s23, 5
      %p128 = por %p126, %p127
      %p130 = scmp.ne.s32.totalorder %s115, %s129
      %p131 = scmp.eq.s32.totalorder %s23, 0
      %p132 = por %p130, %p131
      %s133 = ssub.s32 %s24, %s36
      %p134 = scmp.eq.s32.totalorder %s133, 0
      %s136 = sadd.s32 %s135, 1
      %s137 = scalar_select %p134, %s135, %s136
      %p140 = pneg %p134
      %p141 = scmp.eq.s32.totalorder %s17, 5
      %p142 = por %p140, %p141
      %p143 = scmp.ne.s32.totalorder %s135, %s138
      %p144 = scmp.eq.s32.totalorder %s17, 0
      %p145 = por %p143, %p144
      %p146 = scmp.ne.s32.totalorder %s135, %s138
      %p147 = scmp.eq.s32.totalorder %s22, 5
      %p148 = por %p146, %p147
      %p149 = scmp.ne.s32.totalorder %s138, %s139
      %p150 = scmp.eq.s32.totalorder %s22, 0
      %p151 = por %p149, %p150
      %p152 = scmp.ne.s32.totalorder %s138, %s139
      %p153 = scmp.eq.s32.totalorder %s23, 5
      %p154 = por %p152, %p153
      %p156 = scmp.ne.s32.totalorder %s139, %s155
      %p157 = scmp.eq.s32.totalorder %s23, 0
      %p158 = por %p156, %p157
      %p159 = scmp.le.s32.totalorder 1, %s17
      %p160 = scmp.lt.s32.totalorder %s17, 7
      %p161 = pnand %p159, %p160
      %p162 = pneg %p161
      // Predicated region
      $region9: #{tpu_custom_call.1} parent=5 // pred_check
        _
      $region10: #{tpu_custom_call.1} parent=5 // pred_check_branch
        %164 = sbr.rel (%p161) target = $region12
      $region11: #{tpu_custom_call.1} parent=5 // pred_region
        %s165 = ssub.s32 %s17, 1
        // Predicated region
        $region13: #{tpu_custom_call.1} parent=11 // pred_check
          %p166 = pneg %p76
        $region14: #{tpu_custom_call.1} parent=11 // pred_check_branch
          %168 = sbr.rel (%p166) target = $region16
        $region15: #{tpu_custom_call.1} parent=11 // pred_region
          %170 = vsyncadd [#allocation6], 0
          %s171 = sshll.u32 %s1, 4
          %s172 = int_to_ptr.hbm [resolvable:$true] %s171
          %s173 = sshll.u32 [#allocation5], 4
          %s174 = int_to_ptr.vmem [resolvable:$true] %s173
          %179 = dma.hbm_to_vmem [thread:$0]  %s172, 2048, %s174, [#allocation6], 128, 128, 8
        $region16: #{tpu_custom_call.1} parent=11 // pred_fallthru
          _
        // Predicated region
        $region17: #{tpu_custom_call.1} parent=11 // pred_check
          %p180 = pneg %p125
        $region18: #{tpu_custom_call.1} parent=11 // pred_check_branch
          %182 = sbr.rel (%p180) target = $region20
        $region19: #{tpu_custom_call.1} parent=11 // pred_region
          _
        $region20: #{tpu_custom_call.1} parent=11 // pred_fallthru
          _
      $region12: #{tpu_custom_call.1} parent=5 // pred_fallthru
        _
      %p183 = scmp.lt.s32.totalorder %s17, 6
      // Predicated region
      $region21: #{tpu_custom_call.1} parent=5 // pred_check
        %p184 = pneg %p183
      $region22: #{tpu_custom_call.1} parent=5 // pred_check_branch
        %186 = sbr.rel (%p184) target = $region24
      $region23: #{tpu_custom_call.1} parent=5 // pred_region
        // Predicated region
        $region25: #{tpu_custom_call.1} parent=23 // pred_check
          %p187 = pneg %p49
        $region26: #{tpu_custom_call.1} parent=23 // pred_check_branch
          %189 = sbr.rel (%p187) target = $region28
        $region27: #{tpu_custom_call.1} parent=23 // pred_region
          %s190 = sand.u32 %s17, 1
          %s191 = scalar_lea.sflag [#allocation3], %s190
          %s192 = sand.u32 %s39, 1
          %s193 = smul.addr %s192, 128
          %s194 = scalar_lea.vmem [#allocation2], %s193
          %s195 = smul.u32 32, %s25
          %197 = vsyncadd %s191, 0
          %s198 = smul.addr %s195, 4
          %s199 = scalar_lea.hbm %s0, %s198
          %s200 = sshll.u32 %s199, 4
          %s201 = int_to_ptr.hbm [resolvable:$true] %s200
          %s202 = sshll.u32 %s194, 4
          %s203 = int_to_ptr.vmem [resolvable:$true] %s202
          %208 = dma.hbm_to_vmem [thread:$0]  %s201, 2048, %s203, %s191, 64, 64, 4
        $region28: #{tpu_custom_call.1} parent=23 // pred_fallthru
          _
        // Predicated region
        $region29: #{tpu_custom_call.1} parent=23 // pred_check
          %p209 = pneg %p98
        $region30: #{tpu_custom_call.1} parent=23 // pred_check_branch
          %211 = sbr.rel (%p209) target = $region32
        $region31: #{tpu_custom_call.1} parent=23 // pred_region
          %s212 = sand.u32 %s17, 1
          %s213 = scalar_lea.sflag [#allocation3], %s212
          %s214 = sand.u32 %s88, 1
          %s215 = smul.addr %s214, 256
          %s216 = scalar_lea.vmem [#allocation7], %s215
          %s217 = smul.u32 32, %s25
          %s218 = smul.u32 2, %s24
          %220 = vsyncadd %s213, 0
          %s221 = smul.addr %s217, 6
          %s222 = sadd.s32 %s218, %s221
          %s223 = smul.addr %s222, 4
          %s224 = scalar_lea.hbm %s2, %s223
          %s225 = sshll.u32 %s224, 4
          %s226 = int_to_ptr.hbm [resolvable:$true] %s225
          %s227 = sshll.u32 %s216, 4
          %s228 = int_to_ptr.vmem [resolvable:$true] %s227
          %233 = dma.hbm_to_vmem [thread:$0]  %s226, 4096, %s228, %s213, 384, 128, 8
        $region32: #{tpu_custom_call.1} parent=23 // pred_fallthru
          _
      $region24: #{tpu_custom_call.1} parent=5 // pred_fallthru
        _
      %p234 = scmp.le.s32.totalorder 1, %s17
      %p235 = scmp.lt.s32.totalorder %s17, 7
      %p236 = pnand %p234, %p235
      %p237 = pneg %p236
      // Predicated region
      $region33: #{tpu_custom_call.1} parent=5 // pred_check
        _
      $region34: #{tpu_custom_call.1} parent=5 // pred_check_branch
        %239 = sbr.rel (%p236) target = $region36
      $region35: #{tpu_custom_call.1} parent=5 // pred_region
        %s240 = ssub.s32 %s17, 1
        %s241 = sand.u32 %s22, 1
        %s242 = scalar_lea.sflag [#allocation3], %s241
        %s243 = sand.u32 %s42, 1
        %s244 = smul.addr %s243, 128
        %s245 = scalar_lea.vmem [#allocation2], %s244
        // Predicated region
        $region37: #{tpu_custom_call.1} parent=35 // pred_check
          %p246 = pneg %p55
        $region38: #{tpu_custom_call.1} parent=35 // pred_check_branch
          %248 = sbr.rel (%p246) target = $region40
        $region39: #{tpu_custom_call.1} parent=35 // pred_region
          %250 = dma.done %s242, 2048
        $region40: #{tpu_custom_call.1} parent=35 // pred_fallthru
          _
        // Predicated region
        $region41: #{tpu_custom_call.1} parent=35 // pred_check
          %p251 = pneg %p76
        $region42: #{tpu_custom_call.1} parent=35 // pred_check_branch
          %253 = sbr.rel (%p251) target = $region44
        $region43: #{tpu_custom_call.1} parent=35 // pred_region
          %255 = dma.done [#allocation6], 2048
        $region44: #{tpu_custom_call.1} parent=35 // pred_fallthru
          _
        %s256 = sand.u32 %s22, 1
        %s257 = scalar_lea.sflag [#allocation3], %s256
        %s258 = sand.u32 %s91, 1
        %s259 = smul.addr %s258, 256
        %s260 = scalar_lea.vmem [#allocation7], %s259
        // Predicated region
        $region45: #{tpu_custom_call.1} parent=35 // pred_check
          %p261 = pneg %p104
        $region46: #{tpu_custom_call.1} parent=35 // pred_check_branch
          %263 = sbr.rel (%p261) target = $region48
        $region47: #{tpu_custom_call.1} parent=35 // pred_region
          %265 = dma.done %s257, 4096
        $region48: #{tpu_custom_call.1} parent=35 // pred_fallthru
          _
        %s266 = sand.u32 %s22, 1
        %s267 = scalar_lea.sflag [#allocation3], %s266
        %s268 = sand.u32 %s42, 1
        %s269 = smul.addr %s268, 128
        %s270 = scalar_lea.vmem [#allocation2], %s269
        %p271 = pneg %p55
        %p272 = pneg %p52
        %p273 = pneg %p76
        %p274 = pneg %p73
        %s275 = sand.u32 %s22, 1
        %s276 = scalar_lea.sflag [#allocation3], %s275
        %s277 = sand.u32 %s91, 1
        %s278 = smul.addr %s277, 256
        %s279 = scalar_lea.vmem [#allocation7], %s278
        %p280 = pneg %p104
        %p281 = pneg %p101
        %p282 = pneg %p125
        %p283 = pneg %p122
        %p284 = pneg %p151
        %p285 = pneg %p148
        %s286 = sand.u32 %s138, 1
        %s287 = scalar_lea.sflag [#allocation4], %s286
        %s288 = sand.u32 %s138, 1
        %s289 = smul.addr %s288, 512
        %s290 = scalar_lea.vmem [#allocation8], %s289
        %s291 = smul.u32 32, %s27
        %s292 = smul.u32 32, %s27
        %s293 = smul.u32 2, %s26
        %s294 = smul.u32 32, %s26
        %p295 = scmp.eq.s32.totalorder %s27, 0
        // Predicated region
        $region49: #{tpu_custom_call.1} parent=35 // pred_check
          %p296 = pneg %p295
        $region50: #{tpu_custom_call.1} parent=35 // pred_check_branch
          %298 = sbr.rel (%p296) target = $region52
        $region51: #{tpu_custom_call.1} parent=35 // pred_region
          %299 = vst [vmem:[%s290] sm:$0xff] 0.0
          %300 = vst [vmem:[%s290 + $0x8] sm:$0xff] 0.0
          %301 = vst [vmem:[%s290 + $0x10] sm:$0xff] 0.0
          %302 = vst [vmem:[%s290 + $0x18] sm:$0xff] 0.0
          %303 = vst [vmem:[%s290 + $0x20] sm:$0xff] 0.0
          %304 = vst [vmem:[%s290 + $0x28] sm:$0xff] 0.0
          %305 = vst [vmem:[%s290 + $0x30] sm:$0xff] 0.0
          %306 = vst [vmem:[%s290 + $0x38] sm:$0xff] 0.0
          %307 = vst [vmem:[%s290 + $0x40] sm:$0xff] 0.0
          %308 = vst [vmem:[%s290 + $0x48] sm:$0xff] 0.0
          %309 = vst [vmem:[%s290 + $0x50] sm:$0xff] 0.0
          %310 = vst [vmem:[%s290 + $0x58] sm:$0xff] 0.0
          %311 = vst [vmem:[%s290 + $0x60] sm:$0xff] 0.0
          %312 = vst [vmem:[%s290 + $0x68] sm:$0xff] 0.0
          %313 = vst [vmem:[%s290 + $0x70] sm:$0xff] 0.0
          %314 = vst [vmem:[%s290 + $0x78] sm:$0xff] 0.0
          %315 = vst [vmem:[%s290 + $0x80] sm:$0xff] 0.0
          %316 = vst [vmem:[%s290 + $0x88] sm:$0xff] 0.0
          %317 = vst [vmem:[%s290 + $0x90] sm:$0xff] 0.0
          %318 = vst [vmem:[%s290 + $0x98] sm:$0xff] 0.0
          %319 = vst [vmem:[%s290 + $0xa0] sm:$0xff] 0.0
          %320 = vst [vmem:[%s290 + $0xa8] sm:$0xff] 0.0
          %321 = vst [vmem:[%s290 + $0xb0] sm:$0xff] 0.0
          %322 = vst [vmem:[%s290 + $0xb8] sm:$0xff] 0.0
          %323 = vst [vmem:[%s290 + $0xc0] sm:$0xff] 0.0
          %324 = vst [vmem:[%s290 + $0xc8] sm:$0xff] 0.0
          %325 = vst [vmem:[%s290 + $0xd0] sm:$0xff] 0.0
          %326 = vst [vmem:[%s290 + $0xd8] sm:$0xff] 0.0
          %327 = vst [vmem:[%s290 + $0xe0] sm:$0xff] 0.0
          %328 = vst [vmem:[%s290 + $0xe8] sm:$0xff] 0.0
          %329 = vst [vmem:[%s290 + $0xf0] sm:$0xff] 0.0
          %330 = vst [vmem:[%s290 + $0xf8] sm:$0xff] 0.0
          %331 = vst [vmem:[%s290 + $0x100] sm:$0xff] 0.0
          %332 = vst [vmem:[%s290 + $0x108] sm:$0xff] 0.0
          %333 = vst [vmem:[%s290 + $0x110] sm:$0xff] 0.0
          %334 = vst [vmem:[%s290 + $0x118] sm:$0xff] 0.0
          %335 = vst [vmem:[%s290 + $0x120] sm:$0xff] 0.0
          %336 = vst [vmem:[%s290 + $0x128] sm:$0xff] 0.0
          %337 = vst [vmem:[%s290 + $0x130] sm:$0xff] 0.0
          %338 = vst [vmem:[%s290 + $0x138] sm:$0xff] 0.0
          %339 = vst [vmem:[%s290 + $0x140] sm:$0xff] 0.0
          %340 = vst [vmem:[%s290 + $0x148] sm:$0xff] 0.0
          %341 = vst [vmem:[%s290 + $0x150] sm:$0xff] 0.0
          %342 = vst [vmem:[%s290 + $0x158] sm:$0xff] 0.0
          %343 = vst [vmem:[%s290 + $0x160] sm:$0xff] 0.0
          %344 = vst [vmem:[%s290 + $0x168] sm:$0xff] 0.0
          %345 = vst [vmem:[%s290 + $0x170] sm:$0xff] 0.0
          %346 = vst [vmem:[%s290 + $0x178] sm:$0xff] 0.0
          %347 = vst [vmem:[%s290 + $0x180] sm:$0xff] 0.0
          %348 = vst [vmem:[%s290 + $0x188] sm:$0xff] 0.0
          %349 = vst [vmem:[%s290 + $0x190] sm:$0xff] 0.0
          %350 = vst [vmem:[%s290 + $0x198] sm:$0xff] 0.0
          %351 = vst [vmem:[%s290 + $0x1a0] sm:$0xff] 0.0
          %352 = vst [vmem:[%s290 + $0x1a8] sm:$0xff] 0.0
          %353 = vst [vmem:[%s290 + $0x1b0] sm:$0xff] 0.0
          %354 = vst [vmem:[%s290 + $0x1b8] sm:$0xff] 0.0
          %355 = vst [vmem:[%s290 + $0x1c0] sm:$0xff] 0.0
          %356 = vst [vmem:[%s290 + $0x1c8] sm:$0xff] 0.0
          %357 = vst [vmem:[%s290 + $0x1d0] sm:$0xff] 0.0
          %358 = vst [vmem:[%s290 + $0x1d8] sm:$0xff] 0.0
          %359 = vst [vmem:[%s290 + $0x1e0] sm:$0xff] 0.0
          %360 = vst [vmem:[%s290 + $0x1e8] sm:$0xff] 0.0
          %361 = vst [vmem:[%s290 + $0x1f0] sm:$0xff] 0.0
          %362 = vst [vmem:[%s290 + $0x1f8] sm:$0xff] 0.0
        $region52: #{tpu_custom_call.1} parent=35 // pred_fallthru
          _
        %v363 = vld [vmem:[%s245] sm:$0xf]
        %v364 = vld [vmem:[%s245 + $0x4] sm:$0xf]
        %v365 = vld [vmem:[%s245 + $0x8] sm:$0xf]
        %v366 = vld [vmem:[%s245 + $0xc] sm:$0xf]
        %v367 = vld [vmem:[%s245 + $0x10] sm:$0xf]
        %v368 = vld [vmem:[%s245 + $0x14] sm:$0xf]
        %v369 = vld [vmem:[%s245 + $0x18] sm:$0xf]
        %v370 = vld [vmem:[%s245 + $0x1c] sm:$0xf]
        %v371 = vld [vmem:[%s245 + $0x20] sm:$0xf]
        %v372 = vld [vmem:[%s245 + $0x24] sm:$0xf]
        %v373 = vld [vmem:[%s245 + $0x28] sm:$0xf]
        %v374 = vld [vmem:[%s245 + $0x2c] sm:$0xf]
        %v375 = vld [vmem:[%s245 + $0x30] sm:$0xf]
        %v376 = vld [vmem:[%s245 + $0x34] sm:$0xf]
        %v377 = vld [vmem:[%s245 + $0x38] sm:$0xf]
        %v378 = vld [vmem:[%s245 + $0x3c] sm:$0xf]
        %v379 = vld [vmem:[%s245 + $0x40] sm:$0xf]
        %v380 = vld [vmem:[%s245 + $0x44] sm:$0xf]
        %v381 = vld [vmem:[%s245 + $0x48] sm:$0xf]
        %v382 = vld [vmem:[%s245 + $0x4c] sm:$0xf]
        %v383 = vld [vmem:[%s245 + $0x50] sm:$0xf]
        %v384 = vld [vmem:[%s245 + $0x54] sm:$0xf]
        %v385 = vld [vmem:[%s245 + $0x58] sm:$0xf]
        %v386 = vld [vmem:[%s245 + $0x5c] sm:$0xf]
        %v387 = vld [vmem:[%s245 + $0x60] sm:$0xf]
        %v388 = vld [vmem:[%s245 + $0x64] sm:$0xf]
        %v389 = vld [vmem:[%s245 + $0x68] sm:$0xf]
        %v390 = vld [vmem:[%s245 + $0x6c] sm:$0xf]
        %v391 = vld [vmem:[%s245 + $0x70] sm:$0xf]
        %v392 = vld [vmem:[%s245 + $0x74] sm:$0xf]
        %v393 = vld [vmem:[%s245 + $0x78] sm:$0xf]
        %v394 = vld [vmem:[%s245 + $0x7c] sm:$0xf]
        %v395 = vld [vmem:[#allocation5] sm:$0xff]
        %v396 = vld [vmem:[#allocation5 + $0x8] sm:$0xff]
        %v397 = vld [vmem:[#allocation5 + $0x10] sm:$0xff]
        %v398 = vld [vmem:[#allocation5 + $0x18] sm:$0xff]
        %v399 = vld [vmem:[#allocation5 + $0x20] sm:$0xff]
        %v400 = vld [vmem:[#allocation5 + $0x28] sm:$0xff]
        %v401 = vld [vmem:[#allocation5 + $0x30] sm:$0xff]
        %v402 = vld [vmem:[#allocation5 + $0x38] sm:$0xff]
        %v403 = vld [vmem:[#allocation5 + $0x40] sm:$0xff]
        %v404 = vld [vmem:[#allocation5 + $0x48] sm:$0xff]
        %v405 = vld [vmem:[#allocation5 + $0x50] sm:$0xff]
        %v406 = vld [vmem:[#allocation5 + $0x58] sm:$0xff]
        %v407 = vld [vmem:[#allocation5 + $0x60] sm:$0xff]
        %v408 = vld [vmem:[#allocation5 + $0x68] sm:$0xff]
        %v409 = vld [vmem:[#allocation5 + $0x70] sm:$0xff]
        %v410 = vld [vmem:[#allocation5 + $0x78] sm:$0xff]
        %v443 = vunpack.c.l.b16 %v363
        %v444 = vunpack.c.l.b16 %v364
        %v445 = vunpack.c.l.b16 %v365
        %v446 = vunpack.c.l.b16 %v366
        %v447 = vunpack.c.l.b16 %v367
        %v448 = vunpack.c.l.b16 %v368
        %v449 = vunpack.c.l.b16 %v369
        %v450 = vunpack.c.l.b16 %v370
        %v451 = vunpack.c.l.b16 %v371
        %v452 = vunpack.c.l.b16 %v372
        %v453 = vunpack.c.l.b16 %v373
        %v454 = vunpack.c.l.b16 %v374
        %v455 = vunpack.c.l.b16 %v375
        %v456 = vunpack.c.l.b16 %v376
        %v457 = vunpack.c.l.b16 %v377
        %v458 = vunpack.c.l.b16 %v378
        %v459 = vunpack.c.l.b16 %v379
        %v460 = vunpack.c.l.b16 %v380
        %v461 = vunpack.c.l.b16 %v381
        %v462 = vunpack.c.l.b16 %v382
        %v463 = vunpack.c.l.b16 %v383
        %v464 = vunpack.c.l.b16 %v384
        %v465 = vunpack.c.l.b16 %v385
        %v466 = vunpack.c.l.b16 %v386
        %v467 = vunpack.c.l.b16 %v387
        %v468 = vunpack.c.l.b16 %v388
        %v469 = vunpack.c.l.b16 %v389
        %v470 = vunpack.c.l.b16 %v390
        %v471 = vunpack.c.l.b16 %v391
        %v472 = vunpack.c.l.b16 %v392
        %v473 = vunpack.c.l.b16 %v393
        %v474 = vunpack.c.l.b16 %v394
        %v475 = vpack.c.b16 %v444, %v443
        %v476 = vpack.c.b16 %v446, %v445
        %v477 = vpack.c.b16 %v448, %v447
        %v478 = vpack.c.b16 %v450, %v449
        %v479 = vpack.c.b16 %v452, %v451
        %v480 = vpack.c.b16 %v454, %v453
        %v481 = vpack.c.b16 %v456, %v455
        %v482 = vpack.c.b16 %v458, %v457
        %v483 = vpack.c.b16 %v460, %v459
        %v484 = vpack.c.b16 %v462, %v461
        %v485 = vpack.c.b16 %v464, %v463
        %v486 = vpack.c.b16 %v466, %v465
        %v487 = vpack.c.b16 %v468, %v467
        %v488 = vpack.c.b16 %v470, %v469
        %v489 = vpack.c.b16 %v472, %v471
        %v490 = vpack.c.b16 %v474, %v473
        %v523 = vunpack.c.l.b16 %v395
        %v524 = vunpack.c.h.b16 %v395
        %v525 = vunpack.c.l.b16 %v396
        %v526 = vunpack.c.h.b16 %v396
        %v527 = vunpack.c.l.b16 %v397
        %v528 = vunpack.c.h.b16 %v397
        %v529 = vunpack.c.l.b16 %v398
        %v530 = vunpack.c.h.b16 %v398
        %v531 = vunpack.c.l.b16 %v399
        %v532 = vunpack.c.h.b16 %v399
        %v533 = vunpack.c.l.b16 %v400
        %v534 = vunpack.c.h.b16 %v400
        %v535 = vunpack.c.l.b16 %v401
        %v536 = vunpack.c.h.b16 %v401
        %v537 = vunpack.c.l.b16 %v402
        %v538 = vunpack.c.h.b16 %v402
        %v539 = vunpack.c.l.b16 %v403
        %v540 = vunpack.c.h.b16 %v403
        %v541 = vunpack.c.l.b16 %v404
        %v542 = vunpack.c.h.b16 %v404
        %v543 = vunpack.c.l.b16 %v405
        %v544 = vunpack.c.h.b16 %v405
        %v545 = vunpack.c.l.b16 %v406
        %v546 = vunpack.c.h.b16 %v406
        %v547 = vunpack.c.l.b16 %v407
        %v548 = vunpack.c.h.b16 %v407
        %v549 = vunpack.c.l.b16 %v408
        %v550 = vunpack.c.h.b16 %v408
        %v551 = vunpack.c.l.b16 %v409
        %v552 = vunpack.c.h.b16 %v409
        %v553 = vunpack.c.l.b16 %v410
        %v554 = vunpack.c.h.b16 %v410
        %v555 = vpack.c.b16 %v525, %v523
        %v556 = vpack.c.b16 %v526, %v524
        %v557 = vpack.c.b16 %v529, %v527
        %v558 = vpack.c.b16 %v530, %v528
        %v559 = vpack.c.b16 %v533, %v531
        %v560 = vpack.c.b16 %v534, %v532
        %v561 = vpack.c.b16 %v537, %v535
        %v562 = vpack.c.b16 %v538, %v536
        %v563 = vpack.c.b16 %v541, %v539
        %v564 = vpack.c.b16 %v542, %v540
        %v565 = vpack.c.b16 %v545, %v543
        %v566 = vpack.c.b16 %v546, %v544
        %v567 = vpack.c.b16 %v549, %v547
        %v568 = vpack.c.b16 %v550, %v548
        %v569 = vpack.c.b16 %v553, %v551
        %v570 = vpack.c.b16 %v554, %v552
        %587 = vmatpush.bf16.msra.mxu0 %v569
        %588 = vmatpush.bf16.msra.mxu0 %v567
        %589 = vmatpush.bf16.msra.mxu0 %v565
        %590 = vmatpush.bf16.msra.mxu0 %v563
        %591 = vmatpush.bf16.msra.mxu0 %v561
        %592 = vmatpush.bf16.msra.mxu0 %v559
        %593 = vmatpush.bf16.msra.mxu0 %v557
        %594 = vmatpush.bf16.msra.mxu0 %v555
        %595 = vmatmul.bf16.gmra.mxu0 %v475
        %v596 = vpop.f32.mrf.mxu0
        %v597 = vadd.f32 0.0, %v596
        %v598 = vpop.f32.mrf.mxu0
        %v599 = vadd.f32 0.0, %v598
        %600 = vmatmul.bf16.gmra.mxu0 %v476
        %v601 = vpop.f32.mrf.mxu0
        %v602 = vadd.f32 0.0, %v601
        %v603 = vpop.f32.mrf.mxu0
        %v604 = vadd.f32 0.0, %v603
        %605 = vmatmul.bf16.gmra.mxu0 %v477
        %v606 = vpop.f32.mrf.mxu0
        %v607 = vadd.f32 0.0, %v606
        %v608 = vpop.f32.mrf.mxu0
        %v609 = vadd.f32 0.0, %v608
        %610 = vmatmul.bf16.gmra.mxu0 %v478
        %v611 = vpop.f32.mrf.mxu0
        %v612 = vadd.f32 0.0, %v611
        %v613 = vpop.f32.mrf.mxu0
        %v614 = vadd.f32 0.0, %v613
        %615 = vmatmul.bf16.gmra.mxu0 %v479
        %v616 = vpop.f32.mrf.mxu0
        %v617 = vadd.f32 0.0, %v616
        %v618 = vpop.f32.mrf.mxu0
        %v619 = vadd.f32 0.0, %v618
        %620 = vmatmul.bf16.gmra.mxu0 %v480
        %v621 = vpop.f32.mrf.mxu0
        %v622 = vadd.f32 0.0, %v621
        %v623 = vpop.f32.mrf.mxu0
        %v624 = vadd.f32 0.0, %v623
        %625 = vmatmul.bf16.gmra.mxu0 %v481
        %v626 = vpop.f32.mrf.mxu0
        %v627 = vadd.f32 0.0, %v626
        %v628 = vpop.f32.mrf.mxu0
        %v629 = vadd.f32 0.0, %v628
        %630 = vmatmul.bf16.gmra.mxu0 %v482
        %v631 = vpop.f32.mrf.mxu0
        %v632 = vadd.f32 0.0, %v631
        %v633 = vpop.f32.mrf.mxu0
        %v634 = vadd.f32 0.0, %v633
        %635 = vmatmul.bf16.gmra.mxu0 %v483
        %v636 = vpop.f32.mrf.mxu0
        %v637 = vadd.f32 0.0, %v636
        %v638 = vpop.f32.mrf.mxu0
        %v639 = vadd.f32 0.0, %v638
        %640 = vmatmul.bf16.gmra.mxu0 %v484
        %v641 = vpop.f32.mrf.mxu0
        %v642 = vadd.f32 0.0, %v641
        %v643 = vpop.f32.mrf.mxu0
        %v644 = vadd.f32 0.0, %v643
        %645 = vmatmul.bf16.gmra.mxu0 %v485
        %v646 = vpop.f32.mrf.mxu0
        %v647 = vadd.f32 0.0, %v646
        %v648 = vpop.f32.mrf.mxu0
        %v649 = vadd.f32 0.0, %v648
        %650 = vmatmul.bf16.gmra.mxu0 %v486
        %v651 = vpop.f32.mrf.mxu0
        %v652 = vadd.f32 0.0, %v651
        %v653 = vpop.f32.mrf.mxu0
        %v654 = vadd.f32 0.0, %v653
        %655 = vmatmul.bf16.gmra.mxu0 %v487
        %v656 = vpop.f32.mrf.mxu0
        %v657 = vadd.f32 0.0, %v656
        %v658 = vpop.f32.mrf.mxu0
        %v659 = vadd.f32 0.0, %v658
        %660 = vmatmul.bf16.gmra.mxu0 %v488
        %v661 = vpop.f32.mrf.mxu0
        %v662 = vadd.f32 0.0, %v661
        %v663 = vpop.f32.mrf.mxu0
        %v664 = vadd.f32 0.0, %v663
        %665 = vmatmul.bf16.gmra.mxu0 %v489
        %v666 = vpop.f32.mrf.mxu0
        %v667 = vadd.f32 0.0, %v666
        %v668 = vpop.f32.mrf.mxu0
        %v669 = vadd.f32 0.0, %v668
        %670 = vmatmul.bf16.gmra.mxu0 %v490
        %v671 = vpop.f32.mrf.mxu0
        %v672 = vadd.f32 0.0, %v671
        %v673 = vpop.f32.mrf.mxu0
        %v674 = vadd.f32 0.0, %v673
        %675 = vdwg.mxu0
        %676 = vmatpush.bf16.msra.mxu0 %v570
        %677 = vmatpush.bf16.msra.mxu0 %v568
        %678 = vmatpush.bf16.msra.mxu0 %v566
        %679 = vmatpush.bf16.msra.mxu0 %v564
        %680 = vmatpush.bf16.msra.mxu0 %v562
        %681 = vmatpush.bf16.msra.mxu0 %v560
        %682 = vmatpush.bf16.msra.mxu0 %v558
        %683 = vmatpush.bf16.msra.mxu0 %v556
        %684 = vmatmul.bf16.gmra.mxu0 %v475
        %v685 = vpop.f32.mrf.mxu0
        %v686 = vadd.f32 0.0, %v685
        %v687 = vpop.f32.mrf.mxu0
        %v688 = vadd.f32 0.0, %v687
        %689 = vmatmul.bf16.gmra.mxu0 %v476
        %v690 = vpop.f32.mrf.mxu0
        %v691 = vadd.f32 0.0, %v690
        %v692 = vpop.f32.mrf.mxu0
        %v693 = vadd.f32 0.0, %v692
        %694 = vmatmul.bf16.gmra.mxu0 %v477
        %v695 = vpop.f32.mrf.mxu0
        %v696 = vadd.f32 0.0, %v695
        %v697 = vpop.f32.mrf.mxu0
        %v698 = vadd.f32 0.0, %v697
        %699 = vmatmul.bf16.gmra.mxu0 %v478
        %v700 = vpop.f32.mrf.mxu0
        %v701 = vadd.f32 0.0, %v700
        %v702 = vpop.f32.mrf.mxu0
        %v703 = vadd.f32 0.0, %v702
        %704 = vmatmul.bf16.gmra.mxu0 %v479
        %v705 = vpop.f32.mrf.mxu0
        %v706 = vadd.f32 0.0, %v705
        %v707 = vpop.f32.mrf.mxu0
        %v708 = vadd.f32 0.0, %v707
        %709 = vmatmul.bf16.gmra.mxu0 %v480
        %v710 = vpop.f32.mrf.mxu0
        %v711 = vadd.f32 0.0, %v710
        %v712 = vpop.f32.mrf.mxu0
        %v713 = vadd.f32 0.0, %v712
        %714 = vmatmul.bf16.gmra.mxu0 %v481
        %v715 = vpop.f32.mrf.mxu0
        %v716 = vadd.f32 0.0, %v715
        %v717 = vpop.f32.mrf.mxu0
        %v718 = vadd.f32 0.0, %v717
        %719 = vmatmul.bf16.gmra.mxu0 %v482
        %v720 = vpop.f32.mrf.mxu0
        %v721 = vadd.f32 0.0, %v720
        %v722 = vpop.f32.mrf.mxu0
        %v723 = vadd.f32 0.0, %v722
        %724 = vmatmul.bf16.gmra.mxu0 %v483
        %v725 = vpop.f32.mrf.mxu0
        %v726 = vadd.f32 0.0, %v725
        %v727 = vpop.f32.mrf.mxu0
        %v728 = vadd.f32 0.0, %v727
        %729 = vmatmul.bf16.gmra.mxu0 %v484
        %v730 = vpop.f32.mrf.mxu0
        %v731 = vadd.f32 0.0, %v730
        %v732 = vpop.f32.mrf.mxu0
        %v733 = vadd.f32 0.0, %v732
        %734 = vmatmul.bf16.gmra.mxu0 %v485
        %v735 = vpop.f32.mrf.mxu0
        %v736 = vadd.f32 0.0, %v735
        %v737 = vpop.f32.mrf.mxu0
        %v738 = vadd.f32 0.0, %v737
        %739 = vmatmul.bf16.gmra.mxu0 %v486
        %v740 = vpop.f32.mrf.mxu0
        %v741 = vadd.f32 0.0, %v740
        %v742 = vpop.f32.mrf.mxu0
        %v743 = vadd.f32 0.0, %v742
        %744 = vmatmul.bf16.gmra.mxu0 %v487
        %v745 = vpop.f32.mrf.mxu0
        %v746 = vadd.f32 0.0, %v745
        %v747 = vpop.f32.mrf.mxu0
        %v748 = vadd.f32 0.0, %v747
        %749 = vmatmul.bf16.gmra.mxu0 %v488
        %v750 = vpop.f32.mrf.mxu0
        %v751 = vadd.f32 0.0, %v750
        %v752 = vpop.f32.mrf.mxu0
        %v753 = vadd.f32 0.0, %v752
        %754 = vmatmul.bf16.gmra.mxu0 %v489
        %v755 = vpop.f32.mrf.mxu0
        %v756 = vadd.f32 0.0, %v755
        %v757 = vpop.f32.mrf.mxu0
        %v758 = vadd.f32 0.0, %v757
        %759 = vmatmul.bf16.gmra.mxu0 %v490
        %v760 = vpop.f32.mrf.mxu0
        %v761 = vadd.f32 0.0, %v760
        %v762 = vpop.f32.mrf.mxu0
        %v763 = vadd.f32 0.0, %v762
        %764 = vdwg.mxu0
        %v765 = vld [vmem:[%s290] sm:$0xff]
        %v766 = vld [vmem:[%s290 + $0x8] sm:$0xff]
        %v767 = vld [vmem:[%s290 + $0x10] sm:$0xff]
        %v768 = vld [vmem:[%s290 + $0x18] sm:$0xff]
        %v769 = vld [vmem:[%s290 + $0x20] sm:$0xff]
        %v770 = vld [vmem:[%s290 + $0x28] sm:$0xff]
        %v771 = vld [vmem:[%s290 + $0x30] sm:$0xff]
        %v772 = vld [vmem:[%s290 + $0x38] sm:$0xff]
        %v773 = vld [vmem:[%s290 + $0x40] sm:$0xff]
        %v774 = vld [vmem:[%s290 + $0x48] sm:$0xff]
        %v775 = vld [vmem:[%s290 + $0x50] sm:$0xff]
        %v776 = vld [vmem:[%s290 + $0x58] sm:$0xff]
        %v777 = vld [vmem:[%s290 + $0x60] sm:$0xff]
        %v778 = vld [vmem:[%s290 + $0x68] sm:$0xff]
        %v779 = vld [vmem:[%s290 + $0x70] sm:$0xff]
        %v780 = vld [vmem:[%s290 + $0x78] sm:$0xff]
        %v781 = vld [vmem:[%s290 + $0x80] sm:$0xff]
        %v782 = vld [vmem:[%s290 + $0x88] sm:$0xff]
        %v783 = vld [vmem:[%s290 + $0x90] sm:$0xff]
        %v784 = vld [vmem:[%s290 + $0x98] sm:$0xff]
        %v785 = vld [vmem:[%s290 + $0xa0] sm:$0xff]
        %v786 = vld [vmem:[%s290 + $0xa8] sm:$0xff]
        %v787 = vld [vmem:[%s290 + $0xb0] sm:$0xff]
        %v788 = vld [vmem:[%s290 + $0xb8] sm:$0xff]
        %v789 = vld [vmem:[%s290 + $0xc0] sm:$0xff]
        %v790 = vld [vmem:[%s290 + $0xc8] sm:$0xff]
        %v791 = vld [vmem:[%s290 + $0xd0] sm:$0xff]
        %v792 = vld [vmem:[%s290 + $0xd8] sm:$0xff]
        %v793 = vld [vmem:[%s290 + $0xe0] sm:$0xff]
        %v794 = vld [vmem:[%s290 + $0xe8] sm:$0xff]
        %v795 = vld [vmem:[%s290 + $0xf0] sm:$0xff]
        %v796 = vld [vmem:[%s290 + $0xf8] sm:$0xff]
        %v797 = vld [vmem:[%s290 + $0x100] sm:$0xff]
        %v798 = vld [vmem:[%s290 + $0x108] sm:$0xff]
        %v799 = vld [vmem:[%s290 + $0x110] sm:$0xff]
        %v800 = vld [vmem:[%s290 + $0x118] sm:$0xff]
        %v801 = vld [vmem:[%s290 + $0x120] sm:$0xff]
        %v802 = vld [vmem:[%s290 + $0x128] sm:$0xff]
        %v803 = vld [vmem:[%s290 + $0x130] sm:$0xff]
        %v804 = vld [vmem:[%s290 + $0x138] sm:$0xff]
        %v805 = vld [vmem:[%s290 + $0x140] sm:$0xff]
        %v806 = vld [vmem:[%s290 + $0x148] sm:$0xff]
        %v807 = vld [vmem:[%s290 + $0x150] sm:$0xff]
        %v808 = vld [vmem:[%s290 + $0x158] sm:$0xff]
        %v809 = vld [vmem:[%s290 + $0x160] sm:$0xff]
        %v810 = vld [vmem:[%s290 + $0x168] sm:$0xff]
        %v811 = vld [vmem:[%s290 + $0x170] sm:$0xff]
        %v812 = vld [vmem:[%s290 + $0x178] sm:$0xff]
        %v813 = vld [vmem:[%s290 + $0x180] sm:$0xff]
        %v814 = vld [vmem:[%s290 + $0x188] sm:$0xff]
        %v815 = vld [vmem:[%s290 + $0x190] sm:$0xff]
        %v816 = vld [vmem:[%s290 + $0x198] sm:$0xff]
        %v817 = vld [vmem:[%s290 + $0x1a0] sm:$0xff]
        %v818 = vld [vmem:[%s290 + $0x1a8] sm:$0xff]
        %v819 = vld [vmem:[%s290 + $0x1b0] sm:$0xff]
        %v820 = vld [vmem:[%s290 + $0x1b8] sm:$0xff]
        %v821 = vld [vmem:[%s290 + $0x1c0] sm:$0xff]
        %v822 = vld [vmem:[%s290 + $0x1c8] sm:$0xff]
        %v823 = vld [vmem:[%s290 + $0x1d0] sm:$0xff]
        %v824 = vld [vmem:[%s290 + $0x1d8] sm:$0xff]
        %v825 = vld [vmem:[%s290 + $0x1e0] sm:$0xff]
        %v826 = vld [vmem:[%s290 + $0x1e8] sm:$0xff]
        %v827 = vld [vmem:[%s290 + $0x1f0] sm:$0xff]
        %v828 = vld [vmem:[%s290 + $0x1f8] sm:$0xff]
        %v829 = vld [vmem:[%s260] sm:$0xff]
        %v830 = vld [vmem:[%s260 + $0x8] sm:$0xff]
        %v831 = vld [vmem:[%s260 + $0x10] sm:$0xff]
        %v832 = vld [vmem:[%s260 + $0x18] sm:$0xff]
        %v833 = vld [vmem:[%s260 + $0x20] sm:$0xff]
        %v834 = vld [vmem:[%s260 + $0x28] sm:$0xff]
        %v835 = vld [vmem:[%s260 + $0x30] sm:$0xff]
        %v836 = vld [vmem:[%s260 + $0x38] sm:$0xff]
        %v837 = vld [vmem:[%s260 + $0x40] sm:$0xff]
        %v838 = vld [vmem:[%s260 + $0x48] sm:$0xff]
        %v839 = vld [vmem:[%s260 + $0x50] sm:$0xff]
        %v840 = vld [vmem:[%s260 + $0x58] sm:$0xff]
        %v841 = vld [vmem:[%s260 + $0x60] sm:$0xff]
        %v842 = vld [vmem:[%s260 + $0x68] sm:$0xff]
        %v843 = vld [vmem:[%s260 + $0x70] sm:$0xff]
        %v844 = vld [vmem:[%s260 + $0x78] sm:$0xff]
        %v845 = vld [vmem:[%s260 + $0x80] sm:$0xff]
        %v846 = vld [vmem:[%s260 + $0x88] sm:$0xff]
        %v847 = vld [vmem:[%s260 + $0x90] sm:$0xff]
        %v848 = vld [vmem:[%s260 + $0x98] sm:$0xff]
        %v849 = vld [vmem:[%s260 + $0xa0] sm:$0xff]
        %v850 = vld [vmem:[%s260 + $0xa8] sm:$0xff]
        %v851 = vld [vmem:[%s260 + $0xb0] sm:$0xff]
        %v852 = vld [vmem:[%s260 + $0xb8] sm:$0xff]
        %v853 = vld [vmem:[%s260 + $0xc0] sm:$0xff]
        %v854 = vld [vmem:[%s260 + $0xc8] sm:$0xff]
        %v855 = vld [vmem:[%s260 + $0xd0] sm:$0xff]
        %v856 = vld [vmem:[%s260 + $0xd8] sm:$0xff]
        %v857 = vld [vmem:[%s260 + $0xe0] sm:$0xff]
        %v858 = vld [vmem:[%s260 + $0xe8] sm:$0xff]
        %v859 = vld [vmem:[%s260 + $0xf0] sm:$0xff]
        %v860 = vld [vmem:[%s260 + $0xf8] sm:$0xff]
        %v861 = vpack.c.bf16 %v599, %v597
        %v862 = vpack.c.bf16 %v688, %v686
        %v863 = vpack.c.bf16 %v604, %v602
        %v864 = vpack.c.bf16 %v693, %v691
        %v865 = vpack.c.bf16 %v609, %v607
        %v866 = vpack.c.bf16 %v698, %v696
        %v867 = vpack.c.bf16 %v614, %v612
        %v868 = vpack.c.bf16 %v703, %v701
        %v869 = vpack.c.bf16 %v619, %v617
        %v870 = vpack.c.bf16 %v708, %v706
        %v871 = vpack.c.bf16 %v624, %v622
        %v872 = vpack.c.bf16 %v713, %v711
        %v873 = vpack.c.bf16 %v629, %v627
        %v874 = vpack.c.bf16 %v718, %v716
        %v875 = vpack.c.bf16 %v634, %v632
        %v876 = vpack.c.bf16 %v723, %v721
        %v877 = vpack.c.bf16 %v639, %v637
        %v878 = vpack.c.bf16 %v728, %v726
        %v879 = vpack.c.bf16 %v644, %v642
        %v880 = vpack.c.bf16 %v733, %v731
        %v881 = vpack.c.bf16 %v649, %v647
        %v882 = vpack.c.bf16 %v738, %v736
        %v883 = vpack.c.bf16 %v654, %v652
        %v884 = vpack.c.bf16 %v743, %v741
        %v885 = vpack.c.bf16 %v659, %v657
        %v886 = vpack.c.bf16 %v748, %v746
        %v887 = vpack.c.bf16 %v664, %v662
        %v888 = vpack.c.bf16 %v753, %v751
        %v889 = vpack.c.bf16 %v669, %v667
        %v890 = vpack.c.bf16 %v758, %v756
        %v891 = vpack.c.bf16 %v674, %v672
        %v892 = vpack.c.bf16 %v763, %v761
        %v925 = vunpack.c.l.b16 %v829
        %v926 = vunpack.c.h.b16 %v829
        %v927 = vunpack.c.l.b16 %v830
        %v928 = vunpack.c.h.b16 %v830
        %v929 = vunpack.c.l.b16 %v831
        %v930 = vunpack.c.h.b16 %v831
        %v931 = vunpack.c.l.b16 %v832
        %v932 = vunpack.c.h.b16 %v832
        %v933 = vunpack.c.l.b16 %v833
        %v934 = vunpack.c.h.b16 %v833
        %v935 = vunpack.c.l.b16 %v834
        %v936 = vunpack.c.h.b16 %v834
        %v937 = vunpack.c.l.b16 %v835
        %v938 = vunpack.c.h.b16 %v835
        %v939 = vunpack.c.l.b16 %v836
        %v940 = vunpack.c.h.b16 %v836
        %v941 = vunpack.c.l.b16 %v837
        %v942 = vunpack.c.h.b16 %v837
        %v943 = vunpack.c.l.b16 %v838
        %v944 = vunpack.c.h.b16 %v838
        %v945 = vunpack.c.l.b16 %v839
        %v946 = vunpack.c.h.b16 %v839
        %v947 = vunpack.c.l.b16 %v840
        %v948 = vunpack.c.h.b16 %v840
        %v949 = vunpack.c.l.b16 %v841
        %v950 = vunpack.c.h.b16 %v841
        %v951 = vunpack.c.l.b16 %v842
        %v952 = vunpack.c.h.b16 %v842
        %v953 = vunpack.c.l.b16 %v843
        %v954 = vunpack.c.h.b16 %v843
        %v955 = vunpack.c.l.b16 %v844
        %v956 = vunpack.c.h.b16 %v844
        %v957 = vunpack.c.l.b16 %v845
        %v958 = vunpack.c.h.b16 %v845
        %v959 = vunpack.c.l.b16 %v846
        %v960 = vunpack.c.h.b16 %v846
        %v961 = vunpack.c.l.b16 %v847
        %v962 = vunpack.c.h.b16 %v847
        %v963 = vunpack.c.l.b16 %v848
        %v964 = vunpack.c.h.b16 %v848
        %v965 = vunpack.c.l.b16 %v849
        %v966 = vunpack.c.h.b16 %v849
        %v967 = vunpack.c.l.b16 %v850
        %v968 = vunpack.c.h.b16 %v850
        %v969 = vunpack.c.l.b16 %v851
        %v970 = vunpack.c.h.b16 %v851
        %v971 = vunpack.c.l.b16 %v852
        %v972 = vunpack.c.h.b16 %v852
        %v973 = vunpack.c.l.b16 %v853
        %v974 = vunpack.c.h.b16 %v853
        %v975 = vunpack.c.l.b16 %v854
        %v976 = vunpack.c.h.b16 %v854
        %v977 = vunpack.c.l.b16 %v855
        %v978 = vunpack.c.h.b16 %v855
        %v979 = vunpack.c.l.b16 %v856
        %v980 = vunpack.c.h.b16 %v856
        %v981 = vunpack.c.l.b16 %v857
        %v982 = vunpack.c.h.b16 %v857
        %v983 = vunpack.c.l.b16 %v858
        %v984 = vunpack.c.h.b16 %v858
        %v985 = vunpack.c.l.b16 %v859
        %v986 = vunpack.c.h.b16 %v859
        %v987 = vunpack.c.l.b16 %v860
        %v988 = vunpack.c.h.b16 %v860
        %v989 = vpack.c.b16 %v927, %v925
        %v990 = vpack.c.b16 %v928, %v926
        %v991 = vpack.c.b16 %v931, %v929
        %v992 = vpack.c.b16 %v932, %v930
        %v993 = vpack.c.b16 %v935, %v933
        %v994 = vpack.c.b16 %v936, %v934
        %v995 = vpack.c.b16 %v939, %v937
        %v996 = vpack.c.b16 %v940, %v938
        %v997 = vpack.c.b16 %v943, %v941
        %v998 = vpack.c.b16 %v944, %v942
        %v999 = vpack.c.b16 %v947, %v945
        %v1000 = vpack.c.b16 %v948, %v946
        %v1001 = vpack.c.b16 %v951, %v949
        %v1002 = vpack.c.b16 %v952, %v950
        %v1003 = vpack.c.b16 %v955, %v953
        %v1004 = vpack.c.b16 %v956, %v954
        %v1005 = vpack.c.b16 %v959, %v957
        %v1006 = vpack.c.b16 %v960, %v958
        %v1007 = vpack.c.b16 %v963, %v961
        %v1008 = vpack.c.b16 %v964, %v962
        %v1009 = vpack.c.b16 %v967, %v965
        %v1010 = vpack.c.b16 %v968, %v966
        %v1011 = vpack.c.b16 %v971, %v969
        %v1012 = vpack.c.b16 %v972, %v970
        %v1013 = vpack.c.b16 %v975, %v973
        %v1014 = vpack.c.b16 %v976, %v974
        %v1015 = vpack.c.b16 %v979, %v977
        %v1016 = vpack.c.b16 %v980, %v978
        %v1017 = vpack.c.b16 %v983, %v981
        %v1018 = vpack.c.b16 %v984, %v982
        %v1019 = vpack.c.b16 %v987, %v985
        %v1020 = vpack.c.b16 %v988, %v986
        %1053 = vxpose.binary.xlu0.c.b16.start [1/16] %v990, %v989, 128
        %1054 = vxpose.binary.xlu0.c.b16.cont [2/16] %v992, %v991, 128
        %1055 = vxpose.binary.xlu0.c.b16.cont [3/16] %v994, %v993, 128
        %1056 = vxpose.binary.xlu0.c.b16.cont [4/16] %v996, %v995, 128
        %1057 = vxpose.binary.xlu0.c.b16.cont [5/16] %v998, %v997, 128
        %1058 = vxpose.binary.xlu0.c.b16.cont [6/16] %v1000, %v999, 128
        %1059 = vxpose.binary.xlu0.c.b16.cont [7/16] %v1002, %v1001, 128
        %1060 = vxpose.binary.xlu0.c.b16.end [8/16] %v1004, %v1003, 128
        %v1061 = vpop.trf.xlu0
        %v1062 = vpop.trf.xlu0
        %v1063 = vpop.trf.xlu0
        %v1064 = vpop.trf.xlu0
        %v1065 = vpop.trf.xlu0
        %v1066 = vpop.trf.xlu0
        %v1067 = vpop.trf.xlu0
        %v1068 = vpop.trf.xlu0
        %v1069 = vpop.trf.xlu0
        %v1070 = vpop.trf.xlu0
        %v1071 = vpop.trf.xlu0
        %v1072 = vpop.trf.xlu0
        %v1073 = vpop.trf.xlu0
        %v1074 = vpop.trf.xlu0
        %v1075 = vpop.trf.xlu0
        %v1076 = vpop.trf.xlu0
        %1077 = vxpose.binary.xlu0.c.b16.start [1/16] %v1006, %v1005, 128
        %1078 = vxpose.binary.xlu0.c.b16.cont [2/16] %v1008, %v1007, 128
        %1079 = vxpose.binary.xlu0.c.b16.cont [3/16] %v1010, %v1009, 128
        %1080 = vxpose.binary.xlu0.c.b16.cont [4/16] %v1012, %v1011, 128
        %1081 = vxpose.binary.xlu0.c.b16.cont [5/16] %v1014, %v1013, 128
        %1082 = vxpose.binary.xlu0.c.b16.cont [6/16] %v1016, %v1015, 128
        %1083 = vxpose.binary.xlu0.c.b16.cont [7/16] %v1018, %v1017, 128
        %1084 = vxpose.binary.xlu0.c.b16.end [8/16] %v1020, %v1019, 128
        %v1085 = vpop.trf.xlu0
        %v1086 = vpop.trf.xlu0
        %v1087 = vpop.trf.xlu0
        %v1088 = vpop.trf.xlu0
        %v1089 = vpop.trf.xlu0
        %v1090 = vpop.trf.xlu0
        %v1091 = vpop.trf.xlu0
        %v1092 = vpop.trf.xlu0
        %v1093 = vpop.trf.xlu0
        %v1094 = vpop.trf.xlu0
        %v1095 = vpop.trf.xlu0
        %v1096 = vpop.trf.xlu0
        %v1097 = vpop.trf.xlu0
        %v1098 = vpop.trf.xlu0
        %v1099 = vpop.trf.xlu0
        %v1100 = vpop.trf.xlu0
        %1101 = vmatpush.bf16.msra.mxu0 %v875
        %1102 = vmatpush.bf16.msra.mxu0 %v873
        %1103 = vmatpush.bf16.msra.mxu0 %v871
        %1104 = vmatpush.bf16.msra.mxu0 %v869
        %1105 = vmatpush.bf16.msra.mxu0 %v867
        %1106 = vmatpush.bf16.msra.mxu0 %v865
        %1107 = vmatpush.bf16.msra.mxu0 %v863
        %1108 = vmatpush.bf16.msra.mxu0 %v861
        %1109 = vmatmul.bf16.gmra.mxu0 %v1061
        %v1110 = vpop.f32.mrf.mxu0
        %v1111 = vadd.f32 0.0, %v1110
        %v1112 = vpop.f32.mrf.mxu0
        %v1113 = vadd.f32 0.0, %v1112
        %1114 = vmatmul.bf16.gmra.mxu0 %v1063
        %v1115 = vpop.f32.mrf.mxu0
        %v1116 = vadd.f32 0.0, %v1115
        %v1117 = vpop.f32.mrf.mxu0
        %v1118 = vadd.f32 0.0, %v1117
        %1119 = vmatmul.bf16.gmra.mxu0 %v1065
        %v1120 = vpop.f32.mrf.mxu0
        %v1121 = vadd.f32 0.0, %v1120
        %v1122 = vpop.f32.mrf.mxu0
        %v1123 = vadd.f32 0.0, %v1122
        %1124 = vmatmul.bf16.gmra.mxu0 %v1067
        %v1125 = vpop.f32.mrf.mxu0
        %v1126 = vadd.f32 0.0, %v1125
        %v1127 = vpop.f32.mrf.mxu0
        %v1128 = vadd.f32 0.0, %v1127
        %1129 = vmatmul.bf16.gmra.mxu0 %v1069
        %v1130 = vpop.f32.mrf.mxu0
        %v1131 = vadd.f32 0.0, %v1130
        %v1132 = vpop.f32.mrf.mxu0
        %v1133 = vadd.f32 0.0, %v1132
        %1134 = vmatmul.bf16.gmra.mxu0 %v1071
        %v1135 = vpop.f32.mrf.mxu0
        %v1136 = vadd.f32 0.0, %v1135
        %v1137 = vpop.f32.mrf.mxu0
        %v1138 = vadd.f32 0.0, %v1137
        %1139 = vmatmul.bf16.gmra.mxu0 %v1073
        %v1140 = vpop.f32.mrf.mxu0
        %v1141 = vadd.f32 0.0, %v1140
        %v1142 = vpop.f32.mrf.mxu0
        %v1143 = vadd.f32 0.0, %v1142
        %1144 = vmatmul.bf16.gmra.mxu0 %v1075
        %v1145 = vpop.f32.mrf.mxu0
        %v1146 = vadd.f32 0.0, %v1145
        %v1147 = vpop.f32.mrf.mxu0
        %v1148 = vadd.f32 0.0, %v1147
        %1149 = vmatmul.bf16.gmra.mxu0 %v1062
        %v1150 = vpop.f32.mrf.mxu0
        %v1151 = vadd.f32 0.0, %v1150
        %v1152 = vpop.f32.mrf.mxu0
        %v1153 = vadd.f32 0.0, %v1152
        %1154 = vmatmul.bf16.gmra.mxu0 %v1064
        %v1155 = vpop.f32.mrf.mxu0
        %v1156 = vadd.f32 0.0, %v1155
        %v1157 = vpop.f32.mrf.mxu0
        %v1158 = vadd.f32 0.0, %v1157
        %1159 = vmatmul.bf16.gmra.mxu0 %v1066
        %v1160 = vpop.f32.mrf.mxu0
        %v1161 = vadd.f32 0.0, %v1160
        %v1162 = vpop.f32.mrf.mxu0
        %v1163 = vadd.f32 0.0, %v1162
        %1164 = vmatmul.bf16.gmra.mxu0 %v1068
        %v1165 = vpop.f32.mrf.mxu0
        %v1166 = vadd.f32 0.0, %v1165
        %v1167 = vpop.f32.mrf.mxu0
        %v1168 = vadd.f32 0.0, %v1167
        %1169 = vmatmul.bf16.gmra.mxu0 %v1070
        %v1170 = vpop.f32.mrf.mxu0
        %v1171 = vadd.f32 0.0, %v1170
        %v1172 = vpop.f32.mrf.mxu0
        %v1173 = vadd.f32 0.0, %v1172
        %1174 = vmatmul.bf16.gmra.mxu0 %v1072
        %v1175 = vpop.f32.mrf.mxu0
        %v1176 = vadd.f32 0.0, %v1175
        %v1177 = vpop.f32.mrf.mxu0
        %v1178 = vadd.f32 0.0, %v1177
        %1179 = vmatmul.bf16.gmra.mxu0 %v1074
        %v1180 = vpop.f32.mrf.mxu0
        %v1181 = vadd.f32 0.0, %v1180
        %v1182 = vpop.f32.mrf.mxu0
        %v1183 = vadd.f32 0.0, %v1182
        %1184 = vmatmul.bf16.gmra.mxu0 %v1076
        %v1185 = vpop.f32.mrf.mxu0
        %v1186 = vadd.f32 0.0, %v1185
        %v1187 = vpop.f32.mrf.mxu0
        %v1188 = vadd.f32 0.0, %v1187
        %1189 = vdwg.mxu0
        %1190 = vmatpush.bf16.msra.mxu0 %v891
        %1191 = vmatpush.bf16.msra.mxu0 %v889
        %1192 = vmatpush.bf16.msra.mxu0 %v887
        %1193 = vmatpush.bf16.msra.mxu0 %v885
        %1194 = vmatpush.bf16.msra.mxu0 %v883
        %1195 = vmatpush.bf16.msra.mxu0 %v881
        %1196 = vmatpush.bf16.msra.mxu0 %v879
        %1197 = vmatpush.bf16.msra.mxu0 %v877
        %1198 = vmatmul.bf16.gmra.mxu0 %v1085
        %v1199 = vpop.f32.mrf.mxu0
        %v1200 = vadd.f32 %v1111, %v1199
        %v1201 = vpop.f32.mrf.mxu0
        %v1202 = vadd.f32 %v1113, %v1201
        %1203 = vmatmul.bf16.gmra.mxu0 %v1087
        %v1204 = vpop.f32.mrf.mxu0
        %v1205 = vadd.f32 %v1116, %v1204
        %v1206 = vpop.f32.mrf.mxu0
        %v1207 = vadd.f32 %v1118, %v1206
        %1208 = vmatmul.bf16.gmra.mxu0 %v1089
        %v1209 = vpop.f32.mrf.mxu0
        %v1210 = vadd.f32 %v1121, %v1209
        %v1211 = vpop.f32.mrf.mxu0
        %v1212 = vadd.f32 %v1123, %v1211
        %1213 = vmatmul.bf16.gmra.mxu0 %v1091
        %v1214 = vpop.f32.mrf.mxu0
        %v1215 = vadd.f32 %v1126, %v1214
        %v1216 = vpop.f32.mrf.mxu0
        %v1217 = vadd.f32 %v1128, %v1216
        %1218 = vmatmul.bf16.gmra.mxu0 %v1093
        %v1219 = vpop.f32.mrf.mxu0
        %v1220 = vadd.f32 %v1131, %v1219
        %v1221 = vpop.f32.mrf.mxu0
        %v1222 = vadd.f32 %v1133, %v1221
        %1223 = vmatmul.bf16.gmra.mxu0 %v1095
        %v1224 = vpop.f32.mrf.mxu0
        %v1225 = vadd.f32 %v1136, %v1224
        %v1226 = vpop.f32.mrf.mxu0
        %v1227 = vadd.f32 %v1138, %v1226
        %1228 = vmatmul.bf16.gmra.mxu0 %v1097
        %v1229 = vpop.f32.mrf.mxu0
        %v1230 = vadd.f32 %v1141, %v1229
        %v1231 = vpop.f32.mrf.mxu0
        %v1232 = vadd.f32 %v1143, %v1231
        %1233 = vmatmul.bf16.gmra.mxu0 %v1099
        %v1234 = vpop.f32.mrf.mxu0
        %v1235 = vadd.f32 %v1146, %v1234
        %v1236 = vpop.f32.mrf.mxu0
        %v1237 = vadd.f32 %v1148, %v1236
        %1238 = vmatmul.bf16.gmra.mxu0 %v1086
        %v1239 = vpop.f32.mrf.mxu0
        %v1240 = vadd.f32 %v1151, %v1239
        %v1241 = vpop.f32.mrf.mxu0
        %v1242 = vadd.f32 %v1153, %v1241
        %1243 = vmatmul.bf16.gmra.mxu0 %v1088
        %v1244 = vpop.f32.mrf.mxu0
        %v1245 = vadd.f32 %v1156, %v1244
        %v1246 = vpop.f32.mrf.mxu0
        %v1247 = vadd.f32 %v1158, %v1246
        %1248 = vmatmul.bf16.gmra.mxu0 %v1090
        %v1249 = vpop.f32.mrf.mxu0
        %v1250 = vadd.f32 %v1161, %v1249
        %v1251 = vpop.f32.mrf.mxu0
        %v1252 = vadd.f32 %v1163, %v1251
        %1253 = vmatmul.bf16.gmra.mxu0 %v1092
        %v1254 = vpop.f32.mrf.mxu0
        %v1255 = vadd.f32 %v1166, %v1254
        %v1256 = vpop.f32.mrf.mxu0
        %v1257 = vadd.f32 %v1168, %v1256
        %1258 = vmatmul.bf16.gmra.mxu0 %v1094
        %v1259 = vpop.f32.mrf.mxu0
        %v1260 = vadd.f32 %v1171, %v1259
        %v1261 = vpop.f32.mrf.mxu0
        %v1262 = vadd.f32 %v1173, %v1261
        %1263 = vmatmul.bf16.gmra.mxu0 %v1096
        %v1264 = vpop.f32.mrf.mxu0
        %v1265 = vadd.f32 %v1176, %v1264
        %v1266 = vpop.f32.mrf.mxu0
        %v1267 = vadd.f32 %v1178, %v1266
        %1268 = vmatmul.bf16.gmra.mxu0 %v1098
        %v1269 = vpop.f32.mrf.mxu0
        %v1270 = vadd.f32 %v1181, %v1269
        %v1271 = vpop.f32.mrf.mxu0
        %v1272 = vadd.f32 %v1183, %v1271
        %1273 = vmatmul.bf16.gmra.mxu0 %v1100
        %v1274 = vpop.f32.mrf.mxu0
        %v1275 = vadd.f32 %v1186, %v1274
        %v1276 = vpop.f32.mrf.mxu0
        %v1277 = vadd.f32 %v1188, %v1276
        %1278 = vdwg.mxu0
        %1279 = vmatpush.bf16.msra.mxu0 %v876
        %1280 = vmatpush.bf16.msra.mxu0 %v874
        %1281 = vmatpush.bf16.msra.mxu0 %v872
        %1282 = vmatpush.bf16.msra.mxu0 %v870
        %1283 = vmatpush.bf16.msra.mxu0 %v868
        %1284 = vmatpush.bf16.msra.mxu0 %v866
        %1285 = vmatpush.bf16.msra.mxu0 %v864
        %1286 = vmatpush.bf16.msra.mxu0 %v862
        %1287 = vmatmul.bf16.gmra.mxu0 %v1061
        %v1288 = vpop.f32.mrf.mxu0
        %v1289 = vadd.f32 0.0, %v1288
        %v1290 = vpop.f32.mrf.mxu0
        %v1291 = vadd.f32 0.0, %v1290
        %1292 = vmatmul.bf16.gmra.mxu0 %v1063
        %v1293 = vpop.f32.mrf.mxu0
        %v1294 = vadd.f32 0.0, %v1293
        %v1295 = vpop.f32.mrf.mxu0
        %v1296 = vadd.f32 0.0, %v1295
        %1297 = vmatmul.bf16.gmra.mxu0 %v1065
        %v1298 = vpop.f32.mrf.mxu0
        %v1299 = vadd.f32 0.0, %v1298
        %v1300 = vpop.f32.mrf.mxu0
        %v1301 = vadd.f32 0.0, %v1300
        %1302 = vmatmul.bf16.gmra.mxu0 %v1067
        %v1303 = vpop.f32.mrf.mxu0
        %v1304 = vadd.f32 0.0, %v1303
        %v1305 = vpop.f32.mrf.mxu0
        %v1306 = vadd.f32 0.0, %v1305
        %1307 = vmatmul.bf16.gmra.mxu0 %v1069
        %v1308 = vpop.f32.mrf.mxu0
        %v1309 = vadd.f32 0.0, %v1308
        %v1310 = vpop.f32.mrf.mxu0
        %v1311 = vadd.f32 0.0, %v1310
        %1312 = vmatmul.bf16.gmra.mxu0 %v1071
        %v1313 = vpop.f32.mrf.mxu0
        %v1314 = vadd.f32 0.0, %v1313
        %v1315 = vpop.f32.mrf.mxu0
        %v1316 = vadd.f32 0.0, %v1315
        %1317 = vmatmul.bf16.gmra.mxu0 %v1073
        %v1318 = vpop.f32.mrf.mxu0
        %v1319 = vadd.f32 0.0, %v1318
        %v1320 = vpop.f32.mrf.mxu0
        %v1321 = vadd.f32 0.0, %v1320
        %1322 = vmatmul.bf16.gmra.mxu0 %v1075
        %v1323 = vpop.f32.mrf.mxu0
        %v1324 = vadd.f32 0.0, %v1323
        %v1325 = vpop.f32.mrf.mxu0
        %v1326 = vadd.f32 0.0, %v1325
        %1327 = vmatmul.bf16.gmra.mxu0 %v1062
        %v1328 = vpop.f32.mrf.mxu0
        %v1329 = vadd.f32 0.0, %v1328
        %v1330 = vpop.f32.mrf.mxu0
        %v1331 = vadd.f32 0.0, %v1330
        %1332 = vmatmul.bf16.gmra.mxu0 %v1064
        %v1333 = vpop.f32.mrf.mxu0
        %v1334 = vadd.f32 0.0, %v1333
        %v1335 = vpop.f32.mrf.mxu0
        %v1336 = vadd.f32 0.0, %v1335
        %1337 = vmatmul.bf16.gmra.mxu0 %v1066
        %v1338 = vpop.f32.mrf.mxu0
        %v1339 = vadd.f32 0.0, %v1338
        %v1340 = vpop.f32.mrf.mxu0
        %v1341 = vadd.f32 0.0, %v1340
        %1342 = vmatmul.bf16.gmra.mxu0 %v1068
        %v1343 = vpop.f32.mrf.mxu0
        %v1344 = vadd.f32 0.0, %v1343
        %v1345 = vpop.f32.mrf.mxu0
        %v1346 = vadd.f32 0.0, %v1345
        %1347 = vmatmul.bf16.gmra.mxu0 %v1070
        %v1348 = vpop.f32.mrf.mxu0
        %v1349 = vadd.f32 0.0, %v1348
        %v1350 = vpop.f32.mrf.mxu0
        %v1351 = vadd.f32 0.0, %v1350
        %1352 = vmatmul.bf16.gmra.mxu0 %v1072
        %v1353 = vpop.f32.mrf.mxu0
        %v1354 = vadd.f32 0.0, %v1353
        %v1355 = vpop.f32.mrf.mxu0
        %v1356 = vadd.f32 0.0, %v1355
        %1357 = vmatmul.bf16.gmra.mxu0 %v1074
        %v1358 = vpop.f32.mrf.mxu0
        %v1359 = vadd.f32 0.0, %v1358
        %v1360 = vpop.f32.mrf.mxu0
        %v1361 = vadd.f32 0.0, %v1360
        %1362 = vmatmul.bf16.gmra.mxu0 %v1076
        %v1363 = vpop.f32.mrf.mxu0
        %v1364 = vadd.f32 0.0, %v1363
        %v1365 = vpop.f32.mrf.mxu0
        %v1366 = vadd.f32 0.0, %v1365
        %1367 = vdwg.mxu0
        %1368 = vmatpush.bf16.msra.mxu0 %v892
        %1369 = vmatpush.bf16.msra.mxu0 %v890
        %1370 = vmatpush.bf16.msra.mxu0 %v888
        %1371 = vmatpush.bf16.msra.mxu0 %v886
        %1372 = vmatpush.bf16.msra.mxu0 %v884
        %1373 = vmatpush.bf16.msra.mxu0 %v882
        %1374 = vmatpush.bf16.msra.mxu0 %v880
        %1375 = vmatpush.bf16.msra.mxu0 %v878
        %1376 = vmatmul.bf16.gmra.mxu0 %v1085
        %v1377 = vpop.f32.mrf.mxu0
        %v1378 = vadd.f32 %v1289, %v1377
        %v1379 = vpop.f32.mrf.mxu0
        %v1380 = vadd.f32 %v1291, %v1379
        %1381 = vmatmul.bf16.gmra.mxu0 %v1087
        %v1382 = vpop.f32.mrf.mxu0
        %v1383 = vadd.f32 %v1294, %v1382
        %v1384 = vpop.f32.mrf.mxu0
        %v1385 = vadd.f32 %v1296, %v1384
        %1386 = vmatmul.bf16.gmra.mxu0 %v1089
        %v1387 = vpop.f32.mrf.mxu0
        %v1388 = vadd.f32 %v1299, %v1387
        %v1389 = vpop.f32.mrf.mxu0
        %v1390 = vadd.f32 %v1301, %v1389
        %1391 = vmatmul.bf16.gmra.mxu0 %v1091
        %v1392 = vpop.f32.mrf.mxu0
        %v1393 = vadd.f32 %v1304, %v1392
        %v1394 = vpop.f32.mrf.mxu0
        %v1395 = vadd.f32 %v1306, %v1394
        %1396 = vmatmul.bf16.gmra.mxu0 %v1093
        %v1397 = vpop.f32.mrf.mxu0
        %v1398 = vadd.f32 %v1309, %v1397
        %v1399 = vpop.f32.mrf.mxu0
        %v1400 = vadd.f32 %v1311, %v1399
        %1401 = vmatmul.bf16.gmra.mxu0 %v1095
        %v1402 = vpop.f32.mrf.mxu0
        %v1403 = vadd.f32 %v1314, %v1402
        %v1404 = vpop.f32.mrf.mxu0
        %v1405 = vadd.f32 %v1316, %v1404
        %1406 = vmatmul.bf16.gmra.mxu0 %v1097
        %v1407 = vpop.f32.mrf.mxu0
        %v1408 = vadd.f32 %v1319, %v1407
        %v1409 = vpop.f32.mrf.mxu0
        %v1410 = vadd.f32 %v1321, %v1409
        %1411 = vmatmul.bf16.gmra.mxu0 %v1099
        %v1412 = vpop.f32.mrf.mxu0
        %v1413 = vadd.f32 %v1324, %v1412
        %v1414 = vpop.f32.mrf.mxu0
        %v1415 = vadd.f32 %v1326, %v1414
        %1416 = vmatmul.bf16.gmra.mxu0 %v1086
        %v1417 = vpop.f32.mrf.mxu0
        %v1418 = vadd.f32 %v1329, %v1417
        %v1419 = vpop.f32.mrf.mxu0
        %v1420 = vadd.f32 %v1331, %v1419
        %1421 = vmatmul.bf16.gmra.mxu0 %v1088
        %v1422 = vpop.f32.mrf.mxu0
        %v1423 = vadd.f32 %v1334, %v1422
        %v1424 = vpop.f32.mrf.mxu0
        %v1425 = vadd.f32 %v1336, %v1424
        %1426 = vmatmul.bf16.gmra.mxu0 %v1090
        %v1427 = vpop.f32.mrf.mxu0
        %v1428 = vadd.f32 %v1339, %v1427
        %v1429 = vpop.f32.mrf.mxu0
        %v1430 = vadd.f32 %v1341, %v1429
        %1431 = vmatmul.bf16.gmra.mxu0 %v1092
        %v1432 = vpop.f32.mrf.mxu0
        %v1433 = vadd.f32 %v1344, %v1432
        %v1434 = vpop.f32.mrf.mxu0
        %v1435 = vadd.f32 %v1346, %v1434
        %1436 = vmatmul.bf16.gmra.mxu0 %v1094
        %v1437 = vpop.f32.mrf.mxu0
        %v1438 = vadd.f32 %v1349, %v1437
        %v1439 = vpop.f32.mrf.mxu0
        %v1440 = vadd.f32 %v1351, %v1439
        %1441 = vmatmul.bf16.gmra.mxu0 %v1096
        %v1442 = vpop.f32.mrf.mxu0
        %v1443 = vadd.f32 %v1354, %v1442
        %v1444 = vpop.f32.mrf.mxu0
        %v1445 = vadd.f32 %v1356, %v1444
        %1446 = vmatmul.bf16.gmra.mxu0 %v1098
        %v1447 = vpop.f32.mrf.mxu0
        %v1448 = vadd.f32 %v1359, %v1447
        %v1449 = vpop.f32.mrf.mxu0
        %v1450 = vadd.f32 %v1361, %v1449
        %1451 = vmatmul.bf16.gmra.mxu0 %v1100
        %v1452 = vpop.f32.mrf.mxu0
        %v1453 = vadd.f32 %v1364, %v1452
        %v1454 = vpop.f32.mrf.mxu0
        %v1455 = vadd.f32 %v1366, %v1454
        %1456 = vdwg.mxu0
        %v1457 = vadd.f32 %v765, %v1200
        %v1458 = vadd.f32 %v766, %v1378
        %v1459 = vadd.f32 %v767, %v1202
        %v1460 = vadd.f32 %v768, %v1380
        %v1461 = vadd.f32 %v769, %v1205
        %v1462 = vadd.f32 %v770, %v1383
        %v1463 = vadd.f32 %v771, %v1207
        %v1464 = vadd.f32 %v772, %v1385
        %v1465 = vadd.f32 %v773, %v1210
        %v1466 = vadd.f32 %v774, %v1388
        %v1467 = vadd.f32 %v775, %v1212
        %v1468 = vadd.f32 %v776, %v1390
        %v1469 = vadd.f32 %v777, %v1215
        %v1470 = vadd.f32 %v778, %v1393
        %v1471 = vadd.f32 %v779, %v1217
        %v1472 = vadd.f32 %v780, %v1395
        %v1473 = vadd.f32 %v781, %v1220
        %v1474 = vadd.f32 %v782, %v1398
        %v1475 = vadd.f32 %v783, %v1222
        %v1476 = vadd.f32 %v784, %v1400
        %v1477 = vadd.f32 %v785, %v1225
        %v1478 = vadd.f32 %v786, %v1403
        %v1479 = vadd.f32 %v787, %v1227
        %v1480 = vadd.f32 %v788, %v1405
        %v1481 = vadd.f32 %v789, %v1230
        %v1482 = vadd.f32 %v790, %v1408
        %v1483 = vadd.f32 %v791, %v1232
        %v1484 = vadd.f32 %v792, %v1410
        %v1485 = vadd.f32 %v793, %v1235
        %v1486 = vadd.f32 %v794, %v1413
        %v1487 = vadd.f32 %v795, %v1237
        %v1488 = vadd.f32 %v796, %v1415
        %v1489 = vadd.f32 %v797, %v1240
        %v1490 = vadd.f32 %v798, %v1418
        %v1491 = vadd.f32 %v799, %v1242
        %v1492 = vadd.f32 %v800, %v1420
        %v1493 = vadd.f32 %v801, %v1245
        %v1494 = vadd.f32 %v802, %v1423
        %v1495 = vadd.f32 %v803, %v1247
        %v1496 = vadd.f32 %v804, %v1425
        %v1497 = vadd.f32 %v805, %v1250
        %v1498 = vadd.f32 %v806, %v1428
        %v1499 = vadd.f32 %v807, %v1252
        %v1500 = vadd.f32 %v808, %v1430
        %v1501 = vadd.f32 %v809, %v1255
        %v1502 = vadd.f32 %v810, %v1433
        %v1503 = vadd.f32 %v811, %v1257
        %v1504 = vadd.f32 %v812, %v1435
        %v1505 = vadd.f32 %v813, %v1260
        %v1506 = vadd.f32 %v814, %v1438
        %v1507 = vadd.f32 %v815, %v1262
        %v1508 = vadd.f32 %v816, %v1440
        %v1509 = vadd.f32 %v817, %v1265
        %v1510 = vadd.f32 %v818, %v1443
        %v1511 = vadd.f32 %v819, %v1267
        %v1512 = vadd.f32 %v820, %v1445
        %v1513 = vadd.f32 %v821, %v1270
        %v1514 = vadd.f32 %v822, %v1448
        %v1515 = vadd.f32 %v823, %v1272
        %v1516 = vadd.f32 %v824, %v1450
        %v1517 = vadd.f32 %v825, %v1275
        %v1518 = vadd.f32 %v826, %v1453
        %v1519 = vadd.f32 %v827, %v1277
        %v1520 = vadd.f32 %v828, %v1455
        %1521 = vst [vmem:[%s290] sm:$0xff] %v1457
        %1522 = vst [vmem:[%s290 + $0x8] sm:$0xff] %v1458
        %1523 = vst [vmem:[%s290 + $0x10] sm:$0xff] %v1459
        %1524 = vst [vmem:[%s290 + $0x18] sm:$0xff] %v1460
        %1525 = vst [vmem:[%s290 + $0x20] sm:$0xff] %v1461
        %1526 = vst [vmem:[%s290 + $0x28] sm:$0xff] %v1462
        %1527 = vst [vmem:[%s290 + $0x30] sm:$0xff] %v1463
        %1528 = vst [vmem:[%s290 + $0x38] sm:$0xff] %v1464
        %1529 = vst [vmem:[%s290 + $0x40] sm:$0xff] %v1465
        %1530 = vst [vmem:[%s290 + $0x48] sm:$0xff] %v1466
        %1531 = vst [vmem:[%s290 + $0x50] sm:$0xff] %v1467
        %1532 = vst [vmem:[%s290 + $0x58] sm:$0xff] %v1468
        %1533 = vst [vmem:[%s290 + $0x60] sm:$0xff] %v1469
        %1534 = vst [vmem:[%s290 + $0x68] sm:$0xff] %v1470
        %1535 = vst [vmem:[%s290 + $0x70] sm:$0xff] %v1471
        %1536 = vst [vmem:[%s290 + $0x78] sm:$0xff] %v1472
        %1537 = vst [vmem:[%s290 + $0x80] sm:$0xff] %v1473
        %1538 = vst [vmem:[%s290 + $0x88] sm:$0xff] %v1474
        %1539 = vst [vmem:[%s290 + $0x90] sm:$0xff] %v1475
        %1540 = vst [vmem:[%s290 + $0x98] sm:$0xff] %v1476
        %1541 = vst [vmem:[%s290 + $0xa0] sm:$0xff] %v1477
        %1542 = vst [vmem:[%s290 + $0xa8] sm:$0xff] %v1478
        %1543 = vst [vmem:[%s290 + $0xb0] sm:$0xff] %v1479
        %1544 = vst [vmem:[%s290 + $0xb8] sm:$0xff] %v1480
        %1545 = vst [vmem:[%s290 + $0xc0] sm:$0xff] %v1481
        %1546 = vst [vmem:[%s290 + $0xc8] sm:$0xff] %v1482
        %1547 = vst [vmem:[%s290 + $0xd0] sm:$0xff] %v1483
        %1548 = vst [vmem:[%s290 + $0xd8] sm:$0xff] %v1484
        %1549 = vst [vmem:[%s290 + $0xe0] sm:$0xff] %v1485
        %1550 = vst [vmem:[%s290 + $0xe8] sm:$0xff] %v1486
        %1551 = vst [vmem:[%s290 + $0xf0] sm:$0xff] %v1487
        %1552 = vst [vmem:[%s290 + $0xf8] sm:$0xff] %v1488
        %1553 = vst [vmem:[%s290 + $0x100] sm:$0xff] %v1489
        %1554 = vst [vmem:[%s290 + $0x108] sm:$0xff] %v1490
        %1555 = vst [vmem:[%s290 + $0x110] sm:$0xff] %v1491
        %1556 = vst [vmem:[%s290 + $0x118] sm:$0xff] %v1492
        %1557 = vst [vmem:[%s290 + $0x120] sm:$0xff] %v1493
        %1558 = vst [vmem:[%s290 + $0x128] sm:$0xff] %v1494
        %1559 = vst [vmem:[%s290 + $0x130] sm:$0xff] %v1495
        %1560 = vst [vmem:[%s290 + $0x138] sm:$0xff] %v1496
        %1561 = vst [vmem:[%s290 + $0x140] sm:$0xff] %v1497
        %1562 = vst [vmem:[%s290 + $0x148] sm:$0xff] %v1498
        %1563 = vst [vmem:[%s290 + $0x150] sm:$0xff] %v1499
        %1564 = vst [vmem:[%s290 + $0x158] sm:$0xff] %v1500
        %1565 = vst [vmem:[%s290 + $0x160] sm:$0xff] %v1501
        %1566 = vst [vmem:[%s290 + $0x168] sm:$0xff] %v1502
        %1567 = vst [vmem:[%s290 + $0x170] sm:$0xff] %v1503
        %1568 = vst [vmem:[%s290 + $0x178] sm:$0xff] %v1504
        %1569 = vst [vmem:[%s290 + $0x180] sm:$0xff] %v1505
        %1570 = vst [vmem:[%s290 + $0x188] sm:$0xff] %v1506
        %1571 = vst [vmem:[%s290 + $0x190] sm:$0xff] %v1507
        %1572 = vst [vmem:[%s290 + $0x198] sm:$0xff] %v1508
        %1573 = vst [vmem:[%s290 + $0x1a0] sm:$0xff] %v1509
        %1574 = vst [vmem:[%s290 + $0x1a8] sm:$0xff] %v1510
        %1575 = vst [vmem:[%s290 + $0x1b0] sm:$0xff] %v1511
        %1576 = vst [vmem:[%s290 + $0x1b8] sm:$0xff] %v1512
        %1577 = vst [vmem:[%s290 + $0x1c0] sm:$0xff] %v1513
        %1578 = vst [vmem:[%s290 + $0x1c8] sm:$0xff] %v1514
        %1579 = vst [vmem:[%s290 + $0x1d0] sm:$0xff] %v1515
        %1580 = vst [vmem:[%s290 + $0x1d8] sm:$0xff] %v1516
        %1581 = vst [vmem:[%s290 + $0x1e0] sm:$0xff] %v1517
        %1582 = vst [vmem:[%s290 + $0x1e8] sm:$0xff] %v1518
        %1583 = vst [vmem:[%s290 + $0x1f0] sm:$0xff] %v1519
        %1584 = vst [vmem:[%s290 + $0x1f8] sm:$0xff] %v1520
        %p1585 = scmp.eq.s32.totalorder %s27, 1
        // Predicated region
        $region53: #{tpu_custom_call.1} parent=35 // pred_check
          %p1586 = pneg %p1585
        $region54: #{tpu_custom_call.1} parent=35 // pred_check_branch
          %1588 = sbr.rel (%p1586) target = $region56
        $region55: #{tpu_custom_call.1} parent=35 // pred_region
          %v1589 = vld [vmem:[%s290] sm:$0xff]
          %v1590 = vld [vmem:[%s290 + $0x8] sm:$0xff]
          %v1591 = vld [vmem:[%s290 + $0x10] sm:$0xff]
          %v1592 = vld [vmem:[%s290 + $0x18] sm:$0xff]
          %v1593 = vld [vmem:[%s290 + $0x20] sm:$0xff]
          %v1594 = vld [vmem:[%s290 + $0x28] sm:$0xff]
          %v1595 = vld [vmem:[%s290 + $0x30] sm:$0xff]
          %v1596 = vld [vmem:[%s290 + $0x38] sm:$0xff]
          %v1597 = vld [vmem:[%s290 + $0x40] sm:$0xff]
          %v1598 = vld [vmem:[%s290 + $0x48] sm:$0xff]
          %v1599 = vld [vmem:[%s290 + $0x50] sm:$0xff]
          %v1600 = vld [vmem:[%s290 + $0x58] sm:$0xff]
          %v1601 = vld [vmem:[%s290 + $0x60] sm:$0xff]
          %v1602 = vld [vmem:[%s290 + $0x68] sm:$0xff]
          %v1603 = vld [vmem:[%s290 + $0x70] sm:$0xff]
          %v1604 = vld [vmem:[%s290 + $0x78] sm:$0xff]
          %v1605 = vld [vmem:[%s290 + $0x80] sm:$0xff]
          %v1606 = vld [vmem:[%s290 + $0x88] sm:$0xff]
          %v1607 = vld [vmem:[%s290 + $0x90] sm:$0xff]
          %v1608 = vld [vmem:[%s290 + $0x98] sm:$0xff]
          %v1609 = vld [vmem:[%s290 + $0xa0] sm:$0xff]
          %v1610 = vld [vmem:[%s290 + $0xa8] sm:$0xff]
          %v1611 = vld [vmem:[%s290 + $0xb0] sm:$0xff]
          %v1612 = vld [vmem:[%s290 + $0xb8] sm:$0xff]
          %v1613 = vld [vmem:[%s290 + $0xc0] sm:$0xff]
          %v1614 = vld [vmem:[%s290 + $0xc8] sm:$0xff]
          %v1615 = vld [vmem:[%s290 + $0xd0] sm:$0xff]
          %v1616 = vld [vmem:[%s290 + $0xd8] sm:$0xff]
          %v1617 = vld [vmem:[%s290 + $0xe0] sm:$0xff]
          %v1618 = vld [vmem:[%s290 + $0xe8] sm:$0xff]
          %v1619 = vld [vmem:[%s290 + $0xf0] sm:$0xff]
          %v1620 = vld [vmem:[%s290 + $0xf8] sm:$0xff]
          %v1621 = vld [vmem:[%s290 + $0x100] sm:$0xff]
          %v1622 = vld [vmem:[%s290 + $0x108] sm:$0xff]
          %v1623 = vld [vmem:[%s290 + $0x110] sm:$0xff]
          %v1624 = vld [vmem:[%s290 + $0x118] sm:$0xff]
          %v1625 = vld [vmem:[%s290 + $0x120] sm:$0xff]
          %v1626 = vld [vmem:[%s290 + $0x128] sm:$0xff]
          %v1627 = vld [vmem:[%s290 + $0x130] sm:$0xff]
          %v1628 = vld [vmem:[%s290 + $0x138] sm:$0xff]
          %v1629 = vld [vmem:[%s290 + $0x140] sm:$0xff]
          %v1630 = vld [vmem:[%s290 + $0x148] sm:$0xff]
          %v1631 = vld [vmem:[%s290 + $0x150] sm:$0xff]
          %v1632 = vld [vmem:[%s290 + $0x158] sm:$0xff]
          %v1633 = vld [vmem:[%s290 + $0x160] sm:$0xff]
          %v1634 = vld [vmem:[%s290 + $0x168] sm:$0xff]
          %v1635 = vld [vmem:[%s290 + $0x170] sm:$0xff]
          %v1636 = vld [vmem:[%s290 + $0x178] sm:$0xff]
          %v1637 = vld [vmem:[%s290 + $0x180] sm:$0xff]
          %v1638 = vld [vmem:[%s290 + $0x188] sm:$0xff]
          %v1639 = vld [vmem:[%s290 + $0x190] sm:$0xff]
          %v1640 = vld [vmem:[%s290 + $0x198] sm:$0xff]
          %v1641 = vld [vmem:[%s290 + $0x1a0] sm:$0xff]
          %v1642 = vld [vmem:[%s290 + $0x1a8] sm:$0xff]
          %v1643 = vld [vmem:[%s290 + $0x1b0] sm:$0xff]
          %v1644 = vld [vmem:[%s290 + $0x1b8] sm:$0xff]
          %v1645 = vld [vmem:[%s290 + $0x1c0] sm:$0xff]
          %v1646 = vld [vmem:[%s290 + $0x1c8] sm:$0xff]
          %v1647 = vld [vmem:[%s290 + $0x1d0] sm:$0xff]
          %v1648 = vld [vmem:[%s290 + $0x1d8] sm:$0xff]
          %v1649 = vld [vmem:[%s290 + $0x1e0] sm:$0xff]
          %v1650 = vld [vmem:[%s290 + $0x1e8] sm:$0xff]
          %v1651 = vld [vmem:[%s290 + $0x1f0] sm:$0xff]
          %v1652 = vld [vmem:[%s290 + $0x1f8] sm:$0xff]
          %v1653 = vld [vmem:[%s3] sm:$0x3]
          %v1655 = vperm.slane %v1653, 0
          %v1656 = vperm.slane %v1653, 1
          %v1659 = vadd.f32 %v1589, %v1655
          %v1660 = vadd.f32 %v1590, %v1656
          %v1661 = vadd.f32 %v1591, %v1655
          %v1662 = vadd.f32 %v1592, %v1656
          %v1663 = vadd.f32 %v1593, %v1655
          %v1664 = vadd.f32 %v1594, %v1656
          %v1665 = vadd.f32 %v1595, %v1655
          %v1666 = vadd.f32 %v1596, %v1656
          %v1667 = vadd.f32 %v1597, %v1655
          %v1668 = vadd.f32 %v1598, %v1656
          %v1669 = vadd.f32 %v1599, %v1655
          %v1670 = vadd.f32 %v1600, %v1656
          %v1671 = vadd.f32 %v1601, %v1655
          %v1672 = vadd.f32 %v1602, %v1656
          %v1673 = vadd.f32 %v1603, %v1655
          %v1674 = vadd.f32 %v1604, %v1656
          %v1675 = vadd.f32 %v1605, %v1655
          %v1676 = vadd.f32 %v1606, %v1656
          %v1677 = vadd.f32 %v1607, %v1655
          %v1678 = vadd.f32 %v1608, %v1656
          %v1679 = vadd.f32 %v1609, %v1655
          %v1680 = vadd.f32 %v1610, %v1656
          %v1681 = vadd.f32 %v1611, %v1655
          %v1682 = vadd.f32 %v1612, %v1656
          %v1683 = vadd.f32 %v1613, %v1655
          %v1684 = vadd.f32 %v1614, %v1656
          %v1685 = vadd.f32 %v1615, %v1655
          %v1686 = vadd.f32 %v1616, %v1656
          %v1687 = vadd.f32 %v1617, %v1655
          %v1688 = vadd.f32 %v1618, %v1656
          %v1689 = vadd.f32 %v1619, %v1655
          %v1690 = vadd.f32 %v1620, %v1656
          %v1691 = vadd.f32 %v1621, %v1655
          %v1692 = vadd.f32 %v1622, %v1656
          %v1693 = vadd.f32 %v1623, %v1655
          %v1694 = vadd.f32 %v1624, %v1656
          %v1695 = vadd.f32 %v1625, %v1655
          %v1696 = vadd.f32 %v1626, %v1656
          %v1697 = vadd.f32 %v1627, %v1655
          %v1698 = vadd.f32 %v1628, %v1656
          %v1699 = vadd.f32 %v1629, %v1655
          %v1700 = vadd.f32 %v1630, %v1656
          %v1701 = vadd.f32 %v1631, %v1655
          %v1702 = vadd.f32 %v1632, %v1656
          %v1703 = vadd.f32 %v1633, %v1655
          %v1704 = vadd.f32 %v1634, %v1656
          %v1705 = vadd.f32 %v1635, %v1655
          %v1706 = vadd.f32 %v1636, %v1656
          %v1707 = vadd.f32 %v1637, %v1655
          %v1708 = vadd.f32 %v1638, %v1656
          %v1709 = vadd.f32 %v1639, %v1655
          %v1710 = vadd.f32 %v1640, %v1656
          %v1711 = vadd.f32 %v1641, %v1655
          %v1712 = vadd.f32 %v1642, %v1656
          %v1713 = vadd.f32 %v1643, %v1655
          %v1714 = vadd.f32 %v1644, %v1656
          %v1715 = vadd.f32 %v1645, %v1655
          %v1716 = vadd.f32 %v1646, %v1656
          %v1717 = vadd.f32 %v1647, %v1655
          %v1718 = vadd.f32 %v1648, %v1656
          %v1719 = vadd.f32 %v1649, %v1655
          %v1720 = vadd.f32 %v1650, %v1656
          %v1721 = vadd.f32 %v1651, %v1655
          %v1722 = vadd.f32 %v1652, %v1656
          %1723 = vst [vmem:[%s290] sm:$0xff] %v1659
          %1724 = vst [vmem:[%s290 + $0x8] sm:$0xff] %v1660
          %1725 = vst [vmem:[%s290 + $0x10] sm:$0xff] %v1661
          %1726 = vst [vmem:[%s290 + $0x18] sm:$0xff] %v1662
          %1727 = vst [vmem:[%s290 + $0x20] sm:$0xff] %v1663
          %1728 = vst [vmem:[%s290 + $0x28] sm:$0xff] %v1664
          %1729 = vst [vmem:[%s290 + $0x30] sm:$0xff] %v1665
          %1730 = vst [vmem:[%s290 + $0x38] sm:$0xff] %v1666
          %1731 = vst [vmem:[%s290 + $0x40] sm:$0xff] %v1667
          %1732 = vst [vmem:[%s290 + $0x48] sm:$0xff] %v1668
          %1733 = vst [vmem:[%s290 + $0x50] sm:$0xff] %v1669
          %1734 = vst [vmem:[%s290 + $0x58] sm:$0xff] %v1670
          %1735 = vst [vmem:[%s290 + $0x60] sm:$0xff] %v1671
          %1736 = vst [vmem:[%s290 + $0x68] sm:$0xff] %v1672
          %1737 = vst [vmem:[%s290 + $0x70] sm:$0xff] %v1673
          %1738 = vst [vmem:[%s290 + $0x78] sm:$0xff] %v1674
          %1739 = vst [vmem:[%s290 + $0x80] sm:$0xff] %v1675
          %1740 = vst [vmem:[%s290 + $0x88] sm:$0xff] %v1676
          %1741 = vst [vmem:[%s290 + $0x90] sm:$0xff] %v1677
          %1742 = vst [vmem:[%s290 + $0x98] sm:$0xff] %v1678
          %1743 = vst [vmem:[%s290 + $0xa0] sm:$0xff] %v1679
          %1744 = vst [vmem:[%s290 + $0xa8] sm:$0xff] %v1680
          %1745 = vst [vmem:[%s290 + $0xb0] sm:$0xff] %v1681
          %1746 = vst [vmem:[%s290 + $0xb8] sm:$0xff] %v1682
          %1747 = vst [vmem:[%s290 + $0xc0] sm:$0xff] %v1683
          %1748 = vst [vmem:[%s290 + $0xc8] sm:$0xff] %v1684
          %1749 = vst [vmem:[%s290 + $0xd0] sm:$0xff] %v1685
          %1750 = vst [vmem:[%s290 + $0xd8] sm:$0xff] %v1686
          %1751 = vst [vmem:[%s290 + $0xe0] sm:$0xff] %v1687
          %1752 = vst [vmem:[%s290 + $0xe8] sm:$0xff] %v1688
          %1753 = vst [vmem:[%s290 + $0xf0] sm:$0xff] %v1689
          %1754 = vst [vmem:[%s290 + $0xf8] sm:$0xff] %v1690
          %1755 = vst [vmem:[%s290 + $0x100] sm:$0xff] %v1691
          %1756 = vst [vmem:[%s290 + $0x108] sm:$0xff] %v1692
          %1757 = vst [vmem:[%s290 + $0x110] sm:$0xff] %v1693
          %1758 = vst [vmem:[%s290 + $0x118] sm:$0xff] %v1694
          %1759 = vst [vmem:[%s290 + $0x120] sm:$0xff] %v1695
          %1760 = vst [vmem:[%s290 + $0x128] sm:$0xff] %v1696
          %1761 = vst [vmem:[%s290 + $0x130] sm:$0xff] %v1697
          %1762 = vst [vmem:[%s290 + $0x138] sm:$0xff] %v1698
          %1763 = vst [vmem:[%s290 + $0x140] sm:$0xff] %v1699
          %1764 = vst [vmem:[%s290 + $0x148] sm:$0xff] %v1700
          %1765 = vst [vmem:[%s290 + $0x150] sm:$0xff] %v1701
          %1766 = vst [vmem:[%s290 + $0x158] sm:$0xff] %v1702
          %1767 = vst [vmem:[%s290 + $0x160] sm:$0xff] %v1703
          %1768 = vst [vmem:[%s290 + $0x168] sm:$0xff] %v1704
          %1769 = vst [vmem:[%s290 + $0x170] sm:$0xff] %v1705
          %1770 = vst [vmem:[%s290 + $0x178] sm:$0xff] %v1706
          %1771 = vst [vmem:[%s290 + $0x180] sm:$0xff] %v1707
          %1772 = vst [vmem:[%s290 + $0x188] sm:$0xff] %v1708
          %1773 = vst [vmem:[%s290 + $0x190] sm:$0xff] %v1709
          %1774 = vst [vmem:[%s290 + $0x198] sm:$0xff] %v1710
          %1775 = vst [vmem:[%s290 + $0x1a0] sm:$0xff] %v1711
          %1776 = vst [vmem:[%s290 + $0x1a8] sm:$0xff] %v1712
          %1777 = vst [vmem:[%s290 + $0x1b0] sm:$0xff] %v1713
          %1778 = vst [vmem:[%s290 + $0x1b8] sm:$0xff] %v1714
          %1779 = vst [vmem:[%s290 + $0x1c0] sm:$0xff] %v1715
          %1780 = vst [vmem:[%s290 + $0x1c8] sm:$0xff] %v1716
          %1781 = vst [vmem:[%s290 + $0x1d0] sm:$0xff] %v1717
          %1782 = vst [vmem:[%s290 + $0x1d8] sm:$0xff] %v1718
          %1783 = vst [vmem:[%s290 + $0x1e0] sm:$0xff] %v1719
          %1784 = vst [vmem:[%s290 + $0x1e8] sm:$0xff] %v1720
          %1785 = vst [vmem:[%s290 + $0x1f0] sm:$0xff] %v1721
          %1786 = vst [vmem:[%s290 + $0x1f8] sm:$0xff] %v1722
        $region56: #{tpu_custom_call.1} parent=35 // pred_fallthru
          _
        %s1787 = sand.u32 %s138, 1
        %s1788 = scalar_lea.sflag [#allocation4], %s1787
        %s1789 = sand.u32 %s138, 1
        %s1790 = smul.addr %s1789, 512
        %s1791 = scalar_lea.vmem [#allocation8], %s1790
        // Predicated region
        $region57: #{tpu_custom_call.1} parent=35 // pred_check
          %p1792 = pneg %p148
        $region58: #{tpu_custom_call.1} parent=35 // pred_check_branch
          %1794 = sbr.rel (%p1792) target = $region60
        $region59: #{tpu_custom_call.1} parent=35 // pred_region
          %s1795 = smul.u32 32, %s26
          %1797 = vsyncadd %s1788, 0
          %s1798 = smul.addr %s1795, 2
          %s1799 = smul.addr %s1798, 8
          %s1800 = scalar_lea.hbm %s4, %s1799
          %s1801 = sshll.u32 %s1791, 4
          %s1802 = int_to_ptr.vmem [resolvable:$true] %s1801
          %s1803 = sshll.u32 %s1800, 4
          %s1804 = int_to_ptr.hbm [resolvable:$true] %s1803
          %1809 = dma.vmem_to_hbm [thread:$0]  %s1802, 8192, %s1804, %s1788, 256, 256, 16
        $region60: #{tpu_custom_call.1} parent=35 // pred_fallthru
          _
      $region36: #{tpu_custom_call.1} parent=5 // pred_fallthru
        _
      %p1810 = scmp.le.s32.totalorder 2, %s17
      // Predicated region
      $region61: #{tpu_custom_call.1} parent=5 // pred_check
        %p1811 = pneg %p1810
      $region62: #{tpu_custom_call.1} parent=5 // pred_check_branch
        %1813 = sbr.rel (%p1811) target = $region64
      $region63: #{tpu_custom_call.1} parent=5 // pred_region
        %s1814 = ssub.s32 %s17, 2
        // Predicated region
        $region65: #{tpu_custom_call.1} parent=63 // pred_check
          %p1815 = pneg %p154
        $region66: #{tpu_custom_call.1} parent=63 // pred_check_branch
          %1817 = sbr.rel (%p1815) target = $region68
        $region67: #{tpu_custom_call.1} parent=63 // pred_region
          %s1818 = sand.u32 %s139, 1
          %s1819 = scalar_lea.sflag [#allocation4], %s1818
          %s1820 = sand.u32 %s139, 1
          %s1821 = smul.addr %s1820, 512
          %s1822 = scalar_lea.vmem [#allocation8], %s1821
          %1824 = dma.done %s1819, 8192
        $region68: #{tpu_custom_call.1} parent=63 // pred_fallthru
          _
      $region64: #{tpu_custom_call.1} parent=5 // pred_fallthru
        _
    $region6: #{tpu_custom_call.1} parent=1 // loop_footer
      %s21 = sadd.s32 1, %s17
    $region7: #{tpu_custom_call.1} parent=1 // loop_footer_branch
      %16 = sbr.rel target = $region3
    $region8: #{tpu_custom_call.1} parent=1 // loop_exit
      _
    %1825 = vsyncpa [#allocation3], 1
    %s1826 = scalar_lea.sflag [#allocation3], 1
    %1827 = vsyncpa %s1826, 1
    %1828 = vsyncpa [#allocation6], 1
    %1829 = vsyncpa [#allocation4], 1
    %s1830 = scalar_lea.sflag [#allocation4], 1
    %1831 = vsyncpa %s1830, 1

</llo_original>
